<compile_context>
chip_gen: v7x
topology: tpu7x:2x2x1
jax: 0.10.0
libtpu: 0.0.40
codegen_flags: <defaults>
</compile_context>

<pallas_src>
import functools

import jax
import jax.numpy as jnp
from jax import lax
from jax.experimental import pallas as pl
from jax.experimental.pallas import tpu as pltpu


def _cross_modal_kernel(x_ref, y_ref, mx_ref, my_ref, wq_ref, bq_ref, *rest,
                        num_heads, hidden, s_x, s_y, batch_block,
                        fuse_kv, approx_recip):
    if fuse_kv:
        (wkv_ref, bkv_ref, wff_ref, bff_ref,
         out_ref, q_buf, k_buf, v_buf, hcat_buf) = rest
    else:
        (wk_ref, bk_ref, wv_ref, bv_ref, wff_ref, bff_ref,
         out_ref, q_buf, k_buf, v_buf, hcat_buf) = rest

    dh = hidden // num_heads
    cdt = x_ref.dtype                         # compute/storage dtype (f32 or bf16)

    x = x_ref[...]                            # (bb*S_x, D) fed straight to the MXU
    y = y_ref[...]                            # (bb*S_y, D)

    # Token-parallel projections over the whole batch block (big MXU M dim),
    # accumulated in f32.  `scale` is pre-folded into wq / bq by the wrapper.
    q = jnp.dot(x, wq_ref[...], preferred_element_type=jnp.float32) + bq_ref[...]
    if fuse_kv:
        # D % 128 == 0: one N=2D matmul, lane-aligned split of the result.
        kv = jnp.dot(y, wkv_ref[...], preferred_element_type=jnp.float32) + bkv_ref[...]
        k, v = kv[:, :hidden], kv[:, hidden:]
    else:
        k = jnp.dot(y, wk_ref[...], preferred_element_type=jnp.float32) + bk_ref[...]
        v = jnp.dot(y, wv_ref[...], preferred_element_type=jnp.float32) + bv_ref[...]

    # Park q/k/v in VMEM scratch in the compute dtype: bounds the live vreg set
    # across the batch-row loop and keeps the attention matmuls on the bf16 MXU
    # fast path when compute_dtype=bf16.
    q_buf[...] = q.astype(cdt)
    k_buf[...] = k.astype(cdt)
    v_buf[...] = v.astype(cdt)

    def row(i):
        ox, oy = i * s_x, i * s_y
        if not isinstance(i, int):            # dynamic loop index: alignment hints
            if s_x % 8 == 0:
                ox = pl.multiple_of(ox, 8)
            if s_y % 8 == 0:
                oy = pl.multiple_of(oy, 8)

        qi = q_buf[pl.ds(ox, s_x), :]         # (S_x, D)
        ki = k_buf[pl.ds(oy, s_y), :]         # (S_y, D)
        vi = v_buf[pl.ds(oy, s_y), :]         # (S_y, D)

        # Additive mask rebuilt in-kernel (f32) from the 1-D masks, shared by all
        # heads: madd[n, s] = (1 - mask_x[n] * mask_y[s]) * -1e4  (scores^T form).
        madd = (1.0 - mx_ref[i] * my_ref[i]) * (-10000.0)     # (S_x, S_y)

        for h in range(num_heads):            # static unroll over heads
            qh = qi[:, h * dh:(h + 1) * dh]   # (S_x, dh)
            kh = ki[:, h * dh:(h + 1) * dh]   # (S_y, dh)
            vh = vi[:, h * dh:(h + 1) * dh]   # (S_y, dh)

            # scores^T[n, s] = sum_d q[n, d] * k[s, d] (native trans_b MXU form).
            st = lax.dot_general(qh, kh, (((1,), (1,)), ((), ())),
                                 preferred_element_type=jnp.float32)
            st = st + madd

            # Softmax over the *query* axis (dim=-1 of the PyTorch (S_y, S_x)
            # scores == axis 0 of scores^T), kept entirely in f32.
            m = jnp.max(st, axis=0, keepdims=True)
            e = jnp.exp(st - m)
            denom = jnp.sum(e, axis=0, keepdims=True)
            if approx_recip:
                w = e * pl.reciprocal(denom, approx=True)     # EUP slot, ~free
            else:
                w = e / denom                                 # exact (default)

            # Value mix on the MXU in the compute dtype; write this head's slab
            # into the concat scratch so the ff projection is one K=D matmul.
            out_h = jnp.dot(w.astype(cdt), vh, preferred_element_type=jnp.float32)
            hcat_buf[:, h * dh:(h + 1) * dh] = out_h.astype(cdt)

        # Single (S_x, D) @ (D, D) ff matmul over the concatenated heads.
        ff = jnp.dot(hcat_buf[...], wff_ref[...],
                     preferred_element_type=jnp.float32) + bff_ref[...]
        out_ref[pl.ds(ox, s_x), :] = ff.astype(out_ref.dtype)

    if batch_block <= 4:
        for i in range(batch_block):          # short trip count: static unroll
            row(i)
    else:
        pl.loop(0, batch_block)(row)          # bounded live ranges for big blocks


def _const_spec(shape, single_buffer):
    """BlockSpec for a weight that is identical on every grid step.  With
    single_buffer=True it is held single-buffered (pipeline_mode=pl.Buffered(1))
    so default double-buffering does not eat VMEM at large D (v7x: 64 MiB)."""
    index_map = lambda b: (0,) * len(shape)
    if single_buffer:
        return pl.BlockSpec(shape, index_map, pipeline_mode=pl.Buffered(1))
    return pl.BlockSpec(shape, index_map)


def _auto_batch_block(B, S_x, S_y, D, itemsize, vmem_budget):
    """Largest batch_block targeting ~512 seq_x rows per grid step that (a) keeps
    >= 2 grid steps (both v7x TensorCores get work), (b) fits the per-step working
    set in the VMEM budget, and (c) keeps sublane-aligned activation blocks."""
    def step_bytes(bb):
        act = 2 * bb * (S_x + S_y) * D * itemsize + 2 * bb * S_x * D * 4
        scratch = bb * (S_x + 2 * S_y) * D * itemsize + S_x * D * itemsize
        return act + scratch
    bb = max(1, min(B, max(1, 512 // max(S_x, 1))))
    if B >= 2:
        bb = min(bb, B // 2)
    while bb > 1 and (B % bb != 0 or (bb * S_x) % 8 != 0 or (bb * S_y) % 8 != 0
                      or step_bytes(bb) > vmem_budget):
        bb -= 1
    return max(bb, 1)


def cross_modal_attention(seq_x, seq_y, params, mask_x=None, mask_y=None, *,
                          num_heads=4, scale_exp=0.2, batch_block=None,
                          compute_dtype=None, approx_reciprocal=False,
                          single_buffer_weights=None,
                          vmem_limit_bytes=48 * 1024 * 1024):
    """Pallas implementation of CrossModalAttentionWithMultChannelMask.forward."""
    B, S_x, D = seq_x.shape
    _, S_y, _ = seq_y.shape
    assert D % num_heads == 0
    out_dtype = seq_x.dtype
    cdt = jnp.dtype(compute_dtype) if compute_dtype is not None else jnp.dtype(seq_x.dtype)
    itemsize = cdt.itemsize
    scale = float(D) ** (-scale_exp)

    if single_buffer_weights is None:
        single_buffer_weights = D >= 512     # only worth it when the weights are big
    if batch_block is None:
        batch_block = _auto_batch_block(B, S_x, S_y, D, itemsize, vmem_limit_bytes // 2)
    assert B % batch_block == 0, "batch_block must divide the batch size"
    assert (batch_block * S_x) % 8 == 0 or batch_block == B, \
        "batch_block*S_x must be a multiple of 8 (sublane) unless it spans the full batch"
    assert (batch_block * S_y) % 8 == 0 or batch_block == B, \
        "batch_block*S_y must be a multiple of 8 (sublane) unless it spans the full batch"
    n_steps = B // batch_block

    # Module semantics (apply_mask): the combined outer-product mask requires
    # mask_x; mask_y alone adds nothing (matches the PyTorch module — callers
    # should not expect mask_y to be honored by itself).  Ones-masks keep the
    # kernel branch-free.
    if mask_x is None:
        mx3 = jnp.ones((B, S_x, 1), jnp.float32)
        my3 = jnp.ones((B, 1, S_y), jnp.float32)
    else:
        mx3 = mask_x.astype(jnp.float32).reshape(B, S_x, 1)
        my3 = (mask_y.astype(jnp.float32).reshape(B, 1, S_y) if mask_y is not None
               else jnp.ones((B, 1, S_y), jnp.float32))

    # Host-side weight prep: fold `scale` into the q projection; biases stay f32
    # (added to f32 accumulators); weights are stored in the compute dtype so the
    # MXU sees bf16 operands when compute_dtype=bf16.
    wq = (params["wq"] * scale).astype(cdt)
    bq = (params["bq"] * scale).astype(jnp.float32)
    wff = params["wff"].astype(cdt)
    bff = params["bff"].astype(jnp.float32)

    fuse_kv = (D % 128 == 0)   # lane-aligned split of the fused kv result
    if fuse_kv:
        kv_args = (params["wkv"].astype(cdt), params["bkv"].astype(jnp.float32))
        kv_specs = [_const_spec((D, 2 * D), single_buffer_weights),
                    _const_spec((1, 2 * D), single_buffer_weights)]
    else:
        kv_args = (params["wkv"][:, :D].astype(cdt),
                   params["bkv"][:, :D].astype(jnp.float32),
                   params["wkv"][:, D:].astype(cdt),
                   params["bkv"][:, D:].astype(jnp.float32))
        kv_specs = [_const_spec((D, D), single_buffer_weights),
                    _const_spec((1, D), single_buffer_weights)] * 2

    # 2-D token-major activations (no in-kernel reshapes), compute dtype.
    x2 = seq_x.reshape(B * S_x, D).astype(cdt)
    y2 = seq_y.reshape(B * S_y, D).astype(cdt)

    kernel = functools.partial(
        _cross_modal_kernel, num_heads=num_heads, hidden=D, s_x=S_x, s_y=S_y,
        batch_block=batch_block, fuse_kv=fuse_kv, approx_recip=approx_reciprocal)

    # Advisory cost estimate so XLA schedules the custom call sensibly.
    flops = int(2 * B * S_x * D * D + 4 * B * S_y * D * D
                + 4 * B * S_x * S_y * D + 2 * B * S_x * D * D)
    transcendentals = int(B * num_heads * S_x * S_y)
    bytes_accessed = int(itemsize * (2 * B * S_x * D + B * S_y * D + 6 * D * D)
                         + 4 * B * (S_x + S_y) + 4 * 6 * D)

    grid_spec = pltpu.PrefetchScalarGridSpec(
        num_scalar_prefetch=0,
        grid=(n_steps,),
        in_specs=[
            pl.BlockSpec((batch_block * S_x, D), lambda b: (b, 0)),     # seq_x rows
            pl.BlockSpec((batch_block * S_y, D), lambda b: (b, 0)),     # seq_y rows
            pl.BlockSpec((batch_block, S_x, 1), lambda b: (b, 0, 0)),   # mask_x
            pl.BlockSpec((batch_block, 1, S_y), lambda b: (b, 0, 0)),   # mask_y
            _const_spec((D, D), single_buffer_weights),                 # wq (pre-scaled)
            _const_spec((1, D), single_buffer_weights),                 # bq (pre-scaled)
            *kv_specs,                                                  # wkv | wk,bk,wv,bv
            _const_spec((D, D), single_buffer_weights),                 # wff
            _const_spec((1, D), single_buffer_weights),                 # bff
        ],
        out_specs=pl.BlockSpec((batch_block * S_x, D), lambda b: (b, 0)),
        scratch_shapes=[
            pltpu.VMEM((batch_block * S_x, D), cdt),    # q
            pltpu.VMEM((batch_block * S_y, D), cdt),    # k
            pltpu.VMEM((batch_block * S_y, D), cdt),    # v
            pltpu.VMEM((S_x, D), cdt),                  # concat(heads) per batch row
        ],
    )

    # TODO(synk): at hidden < 128 every vreg / output store is lane-masked
    # (<=25% lane utilization at D=32); pack multiple rows per 128-lane slab in
    # the wrapper layout if production hidden stays this small.
    out2 = pl.pallas_call(
        kernel,
        out_shape=jax.ShapeDtypeStruct((B * S_x, D), out_dtype),
        grid_spec=grid_spec,
        compiler_params=pltpu.CompilerParams(
            dimension_semantics=("parallel",),          # megacore-shardable grid
            vmem_limit_bytes=vmem_limit_bytes),         # explicit; headroom on v7x 64 MiB
        cost_estimate=pl.CostEstimate(flops=flops,
                                      transcendentals=transcendentals,
                                      bytes_accessed=bytes_accessed),
    )(x2, y2, mx3, my3, wq, bq, *kv_args, wff, bff)

    return out2.reshape(B, S_x, D)


def reference(seq_x, seq_y, params, mask_x, mask_y, *, num_heads=4, scale_exp=0.2):
    """Pure-JAX reference mirroring the PyTorch forward (eval mode)."""
    B, S_x, D = seq_x.shape
    _, S_y, _ = seq_y.shape
    dh = D // num_heads
    scale = float(D) ** (-scale_exp)

    q = seq_x @ params["wq"] + params["bq"][0]
    kv = seq_y @ params["wkv"] + params["bkv"][0]
    k, v = kv[..., :D], kv[..., D:]

    def split_heads(t):  # b s (h d) -> b h s d
        return t.reshape(t.shape[0], t.shape[1], num_heads, dh).transpose(0, 2, 1, 3)

    qh, kh, vh = split_heads(q), split_heads(k), split_heads(v)
    scores = jnp.einsum('bhsd,bhnd->bhsn', kh, qh) * scale           # (B,H,S_y,S_x)
    combined = jnp.einsum('bx,by->bxy', mask_y, mask_x)              # (B,S_y,S_x)
    scores = scores + ((1.0 - combined) * -10000.0)[:, None]
    w = jax.nn.softmax(scores, axis=-1)
    out = jnp.einsum('bhsn,bhsd->bhnd', w, vh)                       # (B,H,S_x,dh)
    out = out.transpose(0, 2, 1, 3).reshape(B, S_x, D)
    return out @ params["wff"] + params["bff"][0]


def init_params(key, hidden):
    ks = jax.random.split(key, 6)
    s = 1.0 / jnp.sqrt(hidden)
    return {
        "wq":  jax.random.uniform(ks[0], (hidden, hidden), jnp.float32, -s, s),
        "bq":  jax.random.uniform(ks[1], (1, hidden), jnp.float32, -s, s),
        "wkv": jax.random.uniform(ks[2], (hidden, 2 * hidden), jnp.float32, -s, s),
        "bkv": jax.random.uniform(ks[3], (1, 2 * hidden), jnp.float32, -s, s),
        "wff": jax.random.uniform(ks[4], (hidden, hidden), jnp.float32, -s, s),
        "bff": jax.random.uniform(ks[5], (1, hidden), jnp.float32, -s, s),
    }


if __name__ == "__main__":
    def run_case(name, B, S_x, S_y, D, H, *, batch_block=None,
                 compute_dtype=None, tol=1e-3):
        root = jax.random.PRNGKey(0)
        k_x, k_y, k_mx, k_my, k_p = jax.random.split(root, 5)
        seq_x = jax.random.normal(k_x, (B, S_x, D), jnp.float32)   # action: b n d
        seq_y = jax.random.normal(k_y, (B, S_y, D), jnp.float32)   # text:   b s d
        mask_x = (jax.random.uniform(k_mx, (B, S_x)) > 0.3).astype(jnp.float32)
        mask_y = (jax.random.uniform(k_my, (B, S_y)) > 0.3).astype(jnp.float32)
        params = init_params(k_p, D)

        out = cross_modal_attention(seq_x, seq_y, params, mask_x=mask_x,
                                    mask_y=mask_y, num_heads=H,
                                    batch_block=batch_block,
                                    compute_dtype=compute_dtype)
        out = jax.block_until_ready(out)
        ref = reference(seq_x, seq_y, params, mask_x, mask_y, num_heads=H)
        assert out.shape == (B, S_x, D)
        err = jnp.max(jnp.abs(out - ref))
        assert jnp.allclose(out, ref, rtol=tol, atol=tol), \
            f"{name}: max abs err = {err}"

    # 1) Module-default small shapes, f32, auto batch_block (=1 -> 2 grid steps
    #    so both v7x TensorCores would get work), exact softmax divide.
    run_case("f32_small", B=2, S_x=8, S_y=16, D=32, H=4, tol=1e-3)

    # 2) Larger batch: bf16 MXU operands (f32 softmax math) + the bounded
    #    pl.loop batch-row path (batch_block=8 > 4), still 2 grid steps.
    run_case("bf16_batched", B=16, S_x=8, S_y=16, D=32, H=4,
             batch_block=8, compute_dtype=jnp.bfloat16, tol=5e-2)

    # 3) Lane-aligned hidden size: fused y @ wkv path (D % 128 == 0).
    run_case("f32_fused_kv", B=4, S_x=8, S_y=16, D=128, H=4,
             batch_block=2, tol=1e-3)

    print("KERNEL_OK")
</pallas_src>

<mosaic_0001>
module attributes {stable_mosaic.version = 11 : i64} {
  func.func @_cross_modal_kernel(%arg0: i32, %arg1: memref<8x32xf32, #tpu.memory_space<vmem>>, %arg2: memref<16x32xf32, #tpu.memory_space<vmem>>, %arg3: memref<1x8x1xf32, #tpu.memory_space<vmem>>, %arg4: memref<1x1x16xf32, #tpu.memory_space<vmem>>, %arg5: memref<32x32xf32, #tpu.memory_space<vmem>>, %arg6: memref<1x32xf32, #tpu.memory_space<vmem>>, %arg7: memref<32x32xf32, #tpu.memory_space<vmem>>, %arg8: memref<1x32xf32, #tpu.memory_space<vmem>>, %arg9: memref<32x32xf32, #tpu.memory_space<vmem>>, %arg10: memref<1x32xf32, #tpu.memory_space<vmem>>, %arg11: memref<32x32xf32, #tpu.memory_space<vmem>>, %arg12: memref<1x32xf32, #tpu.memory_space<vmem>>, %arg13: memref<8x32xf32, #tpu.memory_space<vmem>>, %arg14: memref<8x32xf32, #tpu.memory_space<vmem>>, %arg15: memref<16x32xf32, #tpu.memory_space<vmem>>, %arg16: memref<16x32xf32, #tpu.memory_space<vmem>>, %arg17: memref<8x32xf32, #tpu.memory_space<vmem>>) attributes {dimension_semantics = [#tpu.dimension_semantics<parallel>], iteration_bounds = array<i64: 2>, scalar_prefetch = 0 : i64, scratch_operands = 4 : i64, tpu.core_type = #tpu.core_type<tc>, window_params = [{transform_indices = @transform_0, window_bounds = array<i64: 8, 32>}, {transform_indices = @transform_1, window_bounds = array<i64: 16, 32>}, {transform_indices = @transform_2, window_bounds = array<i64: 1, 8, 1>}, {transform_indices = @transform_3, window_bounds = array<i64: 1, 1, 16>}, {pipeline_mode = #tpu.pipeline_mode<synchronous>, transform_indices = @transform_4, window_bounds = array<i64: 32, 32>}, {pipeline_mode = #tpu.pipeline_mode<synchronous>, transform_indices = @transform_5, window_bounds = array<i64: 1, 32>}, {pipeline_mode = #tpu.pipeline_mode<synchronous>, transform_indices = @transform_6, window_bounds = array<i64: 32, 32>}, {pipeline_mode = #tpu.pipeline_mode<synchronous>, transform_indices = @transform_7, window_bounds = array<i64: 1, 32>}, {pipeline_mode = #tpu.pipeline_mode<synchronous>, transform_indices = @transform_8, window_bounds = array<i64: 32, 32>}, {pipeline_mode = #tpu.pipeline_mode<synchronous>, transform_indices = @transform_9, window_bounds = array<i64: 1, 32>}, {pipeline_mode = #tpu.pipeline_mode<synchronous>, transform_indices = @transform_10, window_bounds = array<i64: 32, 32>}, {pipeline_mode = #tpu.pipeline_mode<synchronous>, transform_indices = @transform_11, window_bounds = array<i64: 1, 32>}, {transform_indices = @transform_12, window_bounds = array<i64: 8, 32>}]} {
    %c0 = arith.constant 0 : index
    %c0_0 = arith.constant 0 : index
    %0 = vector.load %arg1[%c0, %c0_0] : memref<8x32xf32, #tpu.memory_space<vmem>>, vector<8x32xf32>
    %c0_1 = arith.constant 0 : index
    %c0_2 = arith.constant 0 : index
    %1 = vector.load %arg2[%c0_1, %c0_2] : memref<16x32xf32, #tpu.memory_space<vmem>>, vector<16x32xf32>
    %c0_3 = arith.constant 0 : index
    %c0_4 = arith.constant 0 : index
    %2 = vector.load %arg5[%c0_3, %c0_4] : memref<32x32xf32, #tpu.memory_space<vmem>>, vector<32x32xf32>
    %cst = arith.constant dense<0.000000e+00> : vector<8x32xf32>
    %3 = tpu.matmul %0, %2, %cst {dimension_numbers = #tpu.dot_dimension_numbers<[1], [0], [0], [1], [0, 0, 1, 1], [], []>} : vector<8x32xf32>, vector<32x32xf32>, vector<8x32xf32> -> vector<8x32xf32>
    %c0_5 = arith.constant 0 : index
    %c0_6 = arith.constant 0 : index
    %4 = vector.load %arg6[%c0_5, %c0_6] : memref<1x32xf32, #tpu.memory_space<vmem>>, vector<1x32xf32>
    %5 = vector.broadcast %4 : vector<1x32xf32> to vector<8x32xf32>
    %6 = arith.addf %3, %5 : vector<8x32xf32>
    %c0_7 = arith.constant 0 : index
    %c0_8 = arith.constant 0 : index
    %7 = vector.load %arg7[%c0_7, %c0_8] : memref<32x32xf32, #tpu.memory_space<vmem>>, vector<32x32xf32>
    %cst_9 = arith.constant dense<0.000000e+00> : vector<16x32xf32>
    %8 = tpu.matmul %1, %7, %cst_9 {dimension_numbers = #tpu.dot_dimension_numbers<[1], [0], [0], [1], [0, 0, 1, 1], [], []>} : vector<16x32xf32>, vector<32x32xf32>, vector<16x32xf32> -> vector<16x32xf32>
    %c0_10 = arith.constant 0 : index
    %c0_11 = arith.constant 0 : index
    %9 = vector.load %arg8[%c0_10, %c0_11] : memref<1x32xf32, #tpu.memory_space<vmem>>, vector<1x32xf32>
    %10 = vector.broadcast %9 : vector<1x32xf32> to vector<16x32xf32>
    %11 = arith.addf %8, %10 : vector<16x32xf32>
    %c0_12 = arith.constant 0 : index
    %c0_13 = arith.constant 0 : index
    %12 = vector.load %arg9[%c0_12, %c0_13] : memref<32x32xf32, #tpu.memory_space<vmem>>, vector<32x32xf32>
    %cst_14 = arith.constant dense<0.000000e+00> : vector<16x32xf32>
    %13 = tpu.matmul %1, %12, %cst_14 {dimension_numbers = #tpu.dot_dimension_numbers<[1], [0], [0], [1], [0, 0, 1, 1], [], []>} : vector<16x32xf32>, vector<32x32xf32>, vector<16x32xf32> -> vector<16x32xf32>
    %c0_15 = arith.constant 0 : index
    %c0_16 = arith.constant 0 : index
    %14 = vector.load %arg10[%c0_15, %c0_16] : memref<1x32xf32, #tpu.memory_space<vmem>>, vector<1x32xf32>
    %15 = vector.broadcast %14 : vector<1x32xf32> to vector<16x32xf32>
    %16 = arith.addf %13, %15 : vector<16x32xf32>
    %c0_17 = arith.constant 0 : index
    %c0_18 = arith.constant 0 : index
    %17 = vector.load %arg14[%c0_17, %c0_18] : memref<8x32xf32, #tpu.memory_space<vmem>>, vector<8x32xf32>
    tpu.vector_store %arg14[%c0_17, %c0_18], %6 {strides = array<i32>} : memref<8x32xf32, #tpu.memory_space<vmem>>, vector<8x32xf32>,
    %c0_19 = arith.constant 0 : index
    %c0_20 = arith.constant 0 : index
    %18 = vector.load %arg15[%c0_19, %c0_20] : memref<16x32xf32, #tpu.memory_space<vmem>>, vector<16x32xf32>
    tpu.vector_store %arg15[%c0_19, %c0_20], %11 {strides = array<i32>} : memref<16x32xf32, #tpu.memory_space<vmem>>, vector<16x32xf32>,
    %c0_21 = arith.constant 0 : index
    %c0_22 = arith.constant 0 : index
    %19 = vector.load %arg16[%c0_21, %c0_22] : memref<16x32xf32, #tpu.memory_space<vmem>>, vector<16x32xf32>
    tpu.vector_store %arg16[%c0_21, %c0_22], %16 {strides = array<i32>} : memref<16x32xf32, #tpu.memory_space<vmem>>, vector<16x32xf32>,
    %c0_23 = arith.constant 0 : index
    %c0_24 = arith.constant 0 : index
    %20 = vector.load %arg14[%c0_23, %c0_24] : memref<8x32xf32, #tpu.memory_space<vmem>>, vector<8x32xf32>
    %c0_25 = arith.constant 0 : index
    %c0_26 = arith.constant 0 : index
    %21 = vector.load %arg15[%c0_25, %c0_26] : memref<16x32xf32, #tpu.memory_space<vmem>>, vector<16x32xf32>
    %c0_27 = arith.constant 0 : index
    %c0_28 = arith.constant 0 : index
    %22 = vector.load %arg16[%c0_27, %c0_28] : memref<16x32xf32, #tpu.memory_space<vmem>>, vector<16x32xf32>
    %c0_29 = arith.constant 0 : index
    %c0_30 = arith.constant 0 : index
    %c0_31 = arith.constant 0 : index
    %23 = vector.load %arg3[%c0_29, %c0_30, %c0_31] : memref<1x8x1xf32, #tpu.memory_space<vmem>>, vector<1x8x1xf32>
    %24 = vector.shape_cast %23 : vector<1x8x1xf32> to vector<8x1xf32>
    %c0_32 = arith.constant 0 : index
    %c0_33 = arith.constant 0 : index
    %c0_34 = arith.constant 0 : index
    %25 = vector.load %arg4[%c0_32, %c0_33, %c0_34] : memref<1x1x16xf32, #tpu.memory_space<vmem>>, vector<1x1x16xf32>
    %26 = vector.shape_cast %25 : vector<1x1x16xf32> to vector<1x16xf32>
    %27 = vector.broadcast %24 : vector<8x1xf32> to vector<8x16xf32>
    %28 = vector.broadcast %26 : vector<1x16xf32> to vector<8x16xf32>
    %29 = arith.mulf %27, %28 : vector<8x16xf32>
    %cst_35 = arith.constant 1.000000e+00 : f32
    %30 = vector.broadcast %cst_35 : f32 to vector<8x16xf32>
    %31 = arith.subf %30, %29 : vector<8x16xf32>
    %cst_36 = arith.constant -1.000000e+04 : f32
    %32 = vector.broadcast %cst_36 : f32 to vector<8x16xf32>
    %33 = arith.mulf %31, %32 : vector<8x16xf32>
    %34 = vector.extract_strided_slice %20 {offsets = [0, 0], sizes = [8, 8], strides = [1, 1]} : vector<8x32xf32> to vector<8x8xf32>
    %35 = vector.extract_strided_slice %21 {offsets = [0, 0], sizes = [16, 8], strides = [1, 1]} : vector<16x32xf32> to vector<16x8xf32>
    %36 = vector.extract_strided_slice %22 {offsets = [0, 0], sizes = [16, 8], strides = [1, 1]} : vector<16x32xf32> to vector<16x8xf32>
    %cst_37 = arith.constant dense<0.000000e+00> : vector<8x16xf32>
    %37 = tpu.matmul %34, %35, %cst_37 {dimension_numbers = #tpu.dot_dimension_numbers<[1], [1], [0], [0], [0, 0, 1, 0], [], []>} : vector<8x8xf32>, vector<16x8xf32>, vector<8x16xf32> -> vector<8x16xf32>
    %38 = arith.addf %37, %33 : vector<8x16xf32>
    %cst_38 = arith.constant dense<0xFF800000> : vector<16xf32>
    %39 = vector.multi_reduction <maximumf>, %38, %cst_38 [0] : vector<8x16xf32> to vector<16xf32>
    %40 = vector.shape_cast %39 : vector<16xf32> to vector<1x16xf32>
    %41 = vector.broadcast %40 : vector<1x16xf32> to vector<8x16xf32>
    %42 = arith.subf %38, %41 : vector<8x16xf32>
    %43 = math.exp %42 : vector<8x16xf32>
    %cst_39 = arith.constant dense<0.000000e+00> : vector<16xf32>
    %44 = vector.multi_reduction <add>, %43, %cst_39 [0] : vector<8x16xf32> to vector<16xf32>
    %45 = vector.shape_cast %44 : vector<16xf32> to vector<1x16xf32>
    %46 = vector.broadcast %45 : vector<1x16xf32> to vector<8x16xf32>
    %47 = arith.divf %43, %46 : vector<8x16xf32>
    %cst_40 = arith.constant dense<0.000000e+00> : vector<8x8xf32>
    %48 = tpu.matmul %47, %36, %cst_40 {dimension_numbers = #tpu.dot_dimension_numbers<[1], [0], [0], [1], [0, 0, 1, 1], [], []>} : vector<8x16xf32>, vector<16x8xf32>, vector<8x8xf32> -> vector<8x8xf32>
    %c0_41 = arith.constant 0 : index
    %c0_42 = arith.constant 0 : index
    %49 = vector.load %arg17[%c0_41, %c0_42] : memref<8x32xf32, #tpu.memory_space<vmem>>, vector<8x8xf32>
    tpu.vector_store %arg17[%c0_41, %c0_42], %48 {strides = array<i32>} : memref<8x32xf32, #tpu.memory_space<vmem>>, vector<8x8xf32>,
    %50 = vector.extract_strided_slice %20 {offsets = [0, 8], sizes = [8, 8], strides = [1, 1]} : vector<8x32xf32> to vector<8x8xf32>
    %51 = vector.extract_strided_slice %21 {offsets = [0, 8], sizes = [16, 8], strides = [1, 1]} : vector<16x32xf32> to vector<16x8xf32>
    %52 = vector.extract_strided_slice %22 {offsets = [0, 8], sizes = [16, 8], strides = [1, 1]} : vector<16x32xf32> to vector<16x8xf32>
    %cst_43 = arith.constant dense<0.000000e+00> : vector<8x16xf32>
    %53 = tpu.matmul %50, %51, %cst_43 {dimension_numbers = #tpu.dot_dimension_numbers<[1], [1], [0], [0], [0, 0, 1, 0], [], []>} : vector<8x8xf32>, vector<16x8xf32>, vector<8x16xf32> -> vector<8x16xf32>
    %54 = arith.addf %53, %33 : vector<8x16xf32>
    %cst_44 = arith.constant dense<0xFF800000> : vector<16xf32>
    %55 = vector.multi_reduction <maximumf>, %54, %cst_44 [0] : vector<8x16xf32> to vector<16xf32>
    %56 = vector.shape_cast %55 : vector<16xf32> to vector<1x16xf32>
    %57 = vector.broadcast %56 : vector<1x16xf32> to vector<8x16xf32>
    %58 = arith.subf %54, %57 : vector<8x16xf32>
    %59 = math.exp %58 : vector<8x16xf32>
    %cst_45 = arith.constant dense<0.000000e+00> : vector<16xf32>
    %60 = vector.multi_reduction <add>, %59, %cst_45 [0] : vector<8x16xf32> to vector<16xf32>
    %61 = vector.shape_cast %60 : vector<16xf32> to vector<1x16xf32>
    %62 = vector.broadcast %61 : vector<1x16xf32> to vector<8x16xf32>
    %63 = arith.divf %59, %62 : vector<8x16xf32>
    %cst_46 = arith.constant dense<0.000000e+00> : vector<8x8xf32>
    %64 = tpu.matmul %63, %52, %cst_46 {dimension_numbers = #tpu.dot_dimension_numbers<[1], [0], [0], [1], [0, 0, 1, 1], [], []>} : vector<8x16xf32>, vector<16x8xf32>, vector<8x8xf32> -> vector<8x8xf32>
    %c0_47 = arith.constant 0 : index
    %c8 = arith.constant 8 : index
    %65 = vector.load %arg17[%c0_47, %c8] : memref<8x32xf32, #tpu.memory_space<vmem>>, vector<8x8xf32>
    tpu.vector_store %arg17[%c0_47, %c8], %64 {strides = array<i32>} : memref<8x32xf32, #tpu.memory_space<vmem>>, vector<8x8xf32>,
    %66 = vector.extract_strided_slice %20 {offsets = [0, 16], sizes = [8, 8], strides = [1, 1]} : vector<8x32xf32> to vector<8x8xf32>
    %67 = vector.extract_strided_slice %21 {offsets = [0, 16], sizes = [16, 8], strides = [1, 1]} : vector<16x32xf32> to vector<16x8xf32>
    %68 = vector.extract_strided_slice %22 {offsets = [0, 16], sizes = [16, 8], strides = [1, 1]} : vector<16x32xf32> to vector<16x8xf32>
    %cst_48 = arith.constant dense<0.000000e+00> : vector<8x16xf32>
    %69 = tpu.matmul %66, %67, %cst_48 {dimension_numbers = #tpu.dot_dimension_numbers<[1], [1], [0], [0], [0, 0, 1, 0], [], []>} : vector<8x8xf32>, vector<16x8xf32>, vector<8x16xf32> -> vector<8x16xf32>
    %70 = arith.addf %69, %33 : vector<8x16xf32>
    %cst_49 = arith.constant dense<0xFF800000> : vector<16xf32>
    %71 = vector.multi_reduction <maximumf>, %70, %cst_49 [0] : vector<8x16xf32> to vector<16xf32>
    %72 = vector.shape_cast %71 : vector<16xf32> to vector<1x16xf32>
    %73 = vector.broadcast %72 : vector<1x16xf32> to vector<8x16xf32>
    %74 = arith.subf %70, %73 : vector<8x16xf32>
    %75 = math.exp %74 : vector<8x16xf32>
    %cst_50 = arith.constant dense<0.000000e+00> : vector<16xf32>
    %76 = vector.multi_reduction <add>, %75, %cst_50 [0] : vector<8x16xf32> to vector<16xf32>
    %77 = vector.shape_cast %76 : vector<16xf32> to vector<1x16xf32>
    %78 = vector.broadcast %77 : vector<1x16xf32> to vector<8x16xf32>
    %79 = arith.divf %75, %78 : vector<8x16xf32>
    %cst_51 = arith.constant dense<0.000000e+00> : vector<8x8xf32>
    %80 = tpu.matmul %79, %68, %cst_51 {dimension_numbers = #tpu.dot_dimension_numbers<[1], [0], [0], [1], [0, 0, 1, 1], [], []>} : vector<8x16xf32>, vector<16x8xf32>, vector<8x8xf32> -> vector<8x8xf32>
    %c0_52 = arith.constant 0 : index
    %c16 = arith.constant 16 : index
    %81 = vector.load %arg17[%c0_52, %c16] : memref<8x32xf32, #tpu.memory_space<vmem>>, vector<8x8xf32>
    tpu.vector_store %arg17[%c0_52, %c16], %80 {strides = array<i32>} : memref<8x32xf32, #tpu.memory_space<vmem>>, vector<8x8xf32>,
    %82 = vector.extract_strided_slice %20 {offsets = [0, 24], sizes = [8, 8], strides = [1, 1]} : vector<8x32xf32> to vector<8x8xf32>
    %83 = vector.extract_strided_slice %21 {offsets = [0, 24], sizes = [16, 8], strides = [1, 1]} : vector<16x32xf32> to vector<16x8xf32>
    %84 = vector.extract_strided_slice %22 {offsets = [0, 24], sizes = [16, 8], strides = [1, 1]} : vector<16x32xf32> to vector<16x8xf32>
    %cst_53 = arith.constant dense<0.000000e+00> : vector<8x16xf32>
    %85 = tpu.matmul %82, %83, %cst_53 {dimension_numbers = #tpu.dot_dimension_numbers<[1], [1], [0], [0], [0, 0, 1, 0], [], []>} : vector<8x8xf32>, vector<16x8xf32>, vector<8x16xf32> -> vector<8x16xf32>
    %86 = arith.addf %85, %33 : vector<8x16xf32>
    %cst_54 = arith.constant dense<0xFF800000> : vector<16xf32>
    %87 = vector.multi_reduction <maximumf>, %86, %cst_54 [0] : vector<8x16xf32> to vector<16xf32>
    %88 = vector.shape_cast %87 : vector<16xf32> to vector<1x16xf32>
    %89 = vector.broadcast %88 : vector<1x16xf32> to vector<8x16xf32>
    %90 = arith.subf %86, %89 : vector<8x16xf32>
    %91 = math.exp %90 : vector<8x16xf32>
    %cst_55 = arith.constant dense<0.000000e+00> : vector<16xf32>
    %92 = vector.multi_reduction <add>, %91, %cst_55 [0] : vector<8x16xf32> to vector<16xf32>
    %93 = vector.shape_cast %92 : vector<16xf32> to vector<1x16xf32>
    %94 = vector.broadcast %93 : vector<1x16xf32> to vector<8x16xf32>
    %95 = arith.divf %91, %94 : vector<8x16xf32>
    %cst_56 = arith.constant dense<0.000000e+00> : vector<8x8xf32>
    %96 = tpu.matmul %95, %84, %cst_56 {dimension_numbers = #tpu.dot_dimension_numbers<[1], [0], [0], [1], [0, 0, 1, 1], [], []>} : vector<8x16xf32>, vector<16x8xf32>, vector<8x8xf32> -> vector<8x8xf32>
    %c0_57 = arith.constant 0 : index
    %c24 = arith.constant 24 : index
    %97 = vector.load %arg17[%c0_57, %c24] : memref<8x32xf32, #tpu.memory_space<vmem>>, vector<8x8xf32>
    tpu.vector_store %arg17[%c0_57, %c24], %96 {strides = array<i32>} : memref<8x32xf32, #tpu.memory_space<vmem>>, vector<8x8xf32>,
    %c0_58 = arith.constant 0 : index
    %c0_59 = arith.constant 0 : index
    %98 = vector.load %arg17[%c0_58, %c0_59] : memref<8x32xf32, #tpu.memory_space<vmem>>, vector<8x32xf32>
    %c0_60 = arith.constant 0 : index
    %c0_61 = arith.constant 0 : index
    %99 = vector.load %arg11[%c0_60, %c0_61] : memref<32x32xf32, #tpu.memory_space<vmem>>, vector<32x32xf32>
    %cst_62 = arith.constant dense<0.000000e+00> : vector<8x32xf32>
    %100 = tpu.matmul %98, %99, %cst_62 {dimension_numbers = #tpu.dot_dimension_numbers<[1], [0], [0], [1], [0, 0, 1, 1], [], []>} : vector<8x32xf32>, vector<32x32xf32>, vector<8x32xf32> -> vector<8x32xf32>
    %c0_63 = arith.constant 0 : index
    %c0_64 = arith.constant 0 : index
    %101 = vector.load %arg12[%c0_63, %c0_64] : memref<1x32xf32, #tpu.memory_space<vmem>>, vector<1x32xf32>
    %102 = vector.broadcast %101 : vector<1x32xf32> to vector<8x32xf32>
    %103 = arith.addf %100, %102 : vector<8x32xf32>
    %c0_65 = arith.constant 0 : index
    %c0_66 = arith.constant 0 : index
    %104 = vector.load %arg13[%c0_65, %c0_66] : memref<8x32xf32, #tpu.memory_space<vmem>>, vector<8x32xf32>
    tpu.vector_store %arg13[%c0_65, %c0_66], %103 {strides = array<i32>} : memref<8x32xf32, #tpu.memory_space<vmem>>, vector<8x32xf32>,
    return
  }
  func.func @transform_0(%arg0: i32) -> (i32, i32) {
    %c0_i32 = arith.constant 0 : i32
    %c0_i32_0 = arith.constant 0 : i32
    return %arg0, %c0_i32 : i32, i32
  }
  func.func @transform_1(%arg0: i32) -> (i32, i32) {
    %c0_i32 = arith.constant 0 : i32
    %c0_i32_0 = arith.constant 0 : i32
    return %arg0, %c0_i32 : i32, i32
  }
  func.func @transform_2(%arg0: i32) -> (i32, i32, i32) {
    %c0_i32 = arith.constant 0 : i32
    %c0_i32_0 = arith.constant 0 : i32
    %c0_i32_1 = arith.constant 0 : i32
    return %arg0, %c0_i32, %c0_i32_0 : i32, i32, i32
  }
  func.func @transform_3(%arg0: i32) -> (i32, i32, i32) {
    %c0_i32 = arith.constant 0 : i32
    %c0_i32_0 = arith.constant 0 : i32
    %c0_i32_1 = arith.constant 0 : i32
    return %arg0, %c0_i32, %c0_i32_0 : i32, i32, i32
  }
  func.func @transform_4(%arg0: i32) -> (i32, i32) {
    %c0_i32 = arith.constant 0 : i32
    %c0_i32_0 = arith.constant 0 : i32
    %c0_i32_1 = arith.constant 0 : i32
    return %c0_i32, %c0_i32_0 : i32, i32
  }
  func.func @transform_5(%arg0: i32) -> (i32, i32) {
    %c0_i32 = arith.constant 0 : i32
    %c0_i32_0 = arith.constant 0 : i32
    %c0_i32_1 = arith.constant 0 : i32
    return %c0_i32, %c0_i32_0 : i32, i32
  }
  func.func @transform_6(%arg0: i32) -> (i32, i32) {
    %c0_i32 = arith.constant 0 : i32
    %c0_i32_0 = arith.constant 0 : i32
    %c0_i32_1 = arith.constant 0 : i32
    return %c0_i32, %c0_i32_0 : i32, i32
  }
  func.func @transform_7(%arg0: i32) -> (i32, i32) {
    %c0_i32 = arith.constant 0 : i32
    %c0_i32_0 = arith.constant 0 : i32
    %c0_i32_1 = arith.constant 0 : i32
    return %c0_i32, %c0_i32_0 : i32, i32
  }
  func.func @transform_8(%arg0: i32) -> (i32, i32) {
    %c0_i32 = arith.constant 0 : i32
    %c0_i32_0 = arith.constant 0 : i32
    %c0_i32_1 = arith.constant 0 : i32
    return %c0_i32, %c0_i32_0 : i32, i32
  }
  func.func @transform_9(%arg0: i32) -> (i32, i32) {
    %c0_i32 = arith.constant 0 : i32
    %c0_i32_0 = arith.constant 0 : i32
    %c0_i32_1 = arith.constant 0 : i32
    return %c0_i32, %c0_i32_0 : i32, i32
  }
  func.func @transform_10(%arg0: i32) -> (i32, i32) {
    %c0_i32 = arith.constant 0 : i32
    %c0_i32_0 = arith.constant 0 : i32
    %c0_i32_1 = arith.constant 0 : i32
    return %c0_i32, %c0_i32_0 : i32, i32
  }
  func.func @transform_11(%arg0: i32) -> (i32, i32) {
    %c0_i32 = arith.constant 0 : i32
    %c0_i32_0 = arith.constant 0 : i32
    %c0_i32_1 = arith.constant 0 : i32
    return %c0_i32, %c0_i32_0 : i32, i32
  }
  func.func @transform_12(%arg0: i32) -> (i32, i32) {
    %c0_i32 = arith.constant 0 : i32
    %c0_i32_0 = arith.constant 0 : i32
    return %arg0, %c0_i32 : i32, i32
  }
}

</mosaic_0001>

<llo_original>
// kernel: tpu_custom_call.1
$region0: #{tpu_custom_call.1}
  #allocation0 [shape = 'u32[]', space=smem, size = 0x4, offset = 0x4, fixed_abs, tag = 'smem constant byte address 0x4 - core index']
  #allocation1 [shape = 'u32[144,128]{1,0:T(1,128)}', space=vmem, size = 0x12000, scoped, tag = 'internal scratch']
  #allocation2 [shape = 'f32[8,32]{1,0:T(8,128)}', space=vmem, size = 0x1000, scoped, tag = 'scratch operand']
  #allocation3 [shape = 'f32[16,32]{1,0:T(8,128)}', space=vmem, size = 0x2000, scoped, tag = 'scratch operand']
  #allocation4 [shape = 'f32[16,32]{1,0:T(8,128)}', space=vmem, size = 0x2000, scoped, tag = 'scratch operand']
  #allocation5 [shape = 'f32[8,32]{1,0:T(8,128)}', space=vmem, size = 0x1000, scoped, tag = 'scratch operand']
  %s0 = inlined_call_operand.hbm [shape: f32[16,32], index: 0, kind: input, shape index: {}]
  %s1 = inlined_call_operand.hbm [shape: f32[32,32], index: 1, kind: input, shape index: {}]
  %s2 = inlined_call_operand.vmem [shape: f32[2,8,1], index: 2, kind: input, shape index: {}]
  %s3 = inlined_call_operand.hbm [shape: f32[2,1,16], index: 3, kind: input, shape index: {}]
  %s4 = inlined_call_operand.vmem [shape: f32[32,32], index: 4, kind: input, shape index: {}]
  %s5 = inlined_call_operand.vmem [shape: f32[1,32], index: 5, kind: input, shape index: {}]
  %s6 = inlined_call_operand.hbm [shape: f32[32,32], index: 6, kind: input, shape index: {}]
  %s7 = inlined_call_operand.vmem [shape: f32[1,32], index: 7, kind: input, shape index: {}]
  %s8 = inlined_call_operand.hbm [shape: f32[32,32], index: 8, kind: input, shape index: {}]
  %s9 = inlined_call_operand.vmem [shape: f32[1,32], index: 9, kind: input, shape index: {}]
  %s10 = inlined_call_operand.hbm [shape: f32[32,32], index: 10, kind: input, shape index: {}]
  %s11 = inlined_call_operand.vmem [shape: f32[1,32], index: 11, kind: input, shape index: {}]
  %s12 = inlined_call_operand.hbm [shape: f32[16,32], index: 12, kind: output, shape index: {}]
  %s13 = sld [smem:[#allocation0]]
  $region105: #{tpu_custom_call.1} parent=0
    _
  %s15 = ssub.s32 1, %s13
  %s16 = scalar_select 0, %s15, %s13
  $region1: #{tpu_custom_call.1} parent=0
    #allocation6 [shape = 'u8[8192]{0}', space=vmem, size = 0x2000, scoped, tag = 'input window, operand 0']
    #allocation7 [shape = 's32[2]{0}', space=sflag, size = 0x8, scoped, tag = 'scoped memory for tpu_custom_call.1']
    #allocation8 [shape = 's32[2]{0}', space=sflag, size = 0x8, scoped, tag = 'scoped memory for tpu_custom_call.1']
    #allocation9 [shape = 'u8[16384]{0}', space=vmem, size = 0x4000, scoped, tag = 'input window, operand 1']
    #allocation10 [shape = 's32[2]{0}', space=sflag, size = 0x8, scoped, tag = 'scoped memory for tpu_custom_call.1']
    #allocation11 [shape = 'u8[1024]{0}', space=vmem, size = 0x400, scoped, tag = 'input window, operand 3']
    #allocation12 [shape = 'u8[16384]{0}', space=vmem, size = 0x4000, scoped, tag = 'input window, operand 6, single buffered']
    #allocation13 [shape = 's32[1]{0}', space=sflag, size = 0x4, scoped, tag = 'scoped memory for tpu_custom_call.1']
    #allocation14 [shape = 'u8[16384]{0}', space=vmem, size = 0x4000, scoped, tag = 'input window, operand 8, single buffered']
    #allocation15 [shape = 'u8[16384]{0}', space=vmem, size = 0x4000, scoped, tag = 'input window, operand 10, single buffered']
    #allocation16 [shape = 's32[1]{0}', space=sflag, size = 0x4, scoped, tag = 'scoped memory for tpu_custom_call.1']
    #allocation17 [shape = 'u8[8192]{0}', space=vmem, size = 0x2000, scoped, tag = 'output window, operand 0']
    %17 = vsyncpa [#allocation7], 0
    %s18 = scalar_lea.sflag [#allocation7], 1
    %19 = vsyncpa %s18, 0
    %20 = vsyncpa [#allocation10], 0
    %s21 = scalar_lea.sflag [#allocation10], 1
    %22 = vsyncpa %s21, 0
    %23 = vsyncpa [#allocation13], 0
    %24 = vsyncpa [#allocation16], 0
    %25 = vsyncpa [#allocation8], 0
    %s26 = scalar_lea.sflag [#allocation8], 1
    %27 = vsyncpa %s26, 0
    loop: start=0, step=1, limit=4
    $region2: #{tpu_custom_call.1} parent=1 // loop_pre_header
      _
    $region3: #{tpu_custom_call.1} parent=1 // loop_header
      %s29 = sphi 0, %s33
      %p30 = scmp.ge.s32.totalorder %s29, 4
      %s39 = sphi 0, %s41
      %s42 = sphi 0, %s39
      %s43 = sphi 0, %s42
      %s59 = sphi 0, %s43
      %s65 = sphi 0, %s67
      %s68 = sphi 0, %s65
      %s69 = sphi 0, %s68
      %s85 = sphi 0, %s69
      %s91 = sphi 0, %s93
      %s94 = sphi 0, %s91
      %s95 = sphi 0, %s94
      %s111 = sphi 0, %s95
      %s117 = sphi 0, %s119
      %s120 = sphi 0, %s117
      %s121 = sphi 0, %s120
      %s137 = sphi 0, %s121
      %s141 = sphi 0, %s141
      %s143 = sphi 0, %s141
      %s144 = sphi 0, %s143
      %s158 = sphi 0, %s144
      %s162 = sphi 0, %s162
      %s164 = sphi 0, %s162
      %s165 = sphi 0, %s164
      %s179 = sphi 0, %s165
      %s183 = sphi 0, %s183
      %s185 = sphi 0, %s183
      %s186 = sphi 0, %s185
      %s200 = sphi 0, %s186
      %s204 = sphi 0, %s204
      %s206 = sphi 0, %s204
      %s207 = sphi 0, %s206
      %s221 = sphi 0, %s207
      %s225 = sphi 0, %s225
      %s227 = sphi 0, %s225
      %s228 = sphi 0, %s227
      %s242 = sphi 0, %s228
      %s246 = sphi 0, %s246
      %s248 = sphi 0, %s246
      %s249 = sphi 0, %s248
      %s263 = sphi 0, %s249
      %s267 = sphi 0, %s267
      %s269 = sphi 0, %s267
      %s270 = sphi 0, %s269
      %s284 = sphi 0, %s270
      %s288 = sphi 0, %s288
      %s290 = sphi 0, %s288
      %s291 = sphi 0, %s290
      %s305 = sphi 0, %s291
      %s311 = sphi 0, %s313
      %s314 = sphi 0, %s311
      %s315 = sphi 0, %s314
      %s331 = sphi 0, %s315
    $region4: #{tpu_custom_call.1} parent=1 // loop_header_branch
      %32 = sbr.rel (%p30) target = $region8
    $region5: #{tpu_custom_call.1} parent=1 // loop_body
      %s34 = ssub.s32 %s29, 1
      %s35 = ssub.s32 %s29, 2
      %s36 = sadd.s32 %s29, 1
      %s37 = ssub.s32 %s29, %s36
      %p38 = scmp.eq.s32.totalorder %s37, 0
      %s40 = sadd.s32 %s39, 1
      %s41 = scalar_select %p38, %s39, %s40
      %p44 = pneg %p38
      %p45 = scmp.eq.s32.totalorder %s29, 1
      %p46 = por %p44, %p45
      %p47 = scmp.ne.s32.totalorder %s39, %s42
      %p48 = scmp.eq.s32.totalorder %s29, 0
      %p49 = por %p47, %p48
      %p50 = scmp.ne.s32.totalorder %s39, %s42
      %p51 = scmp.eq.s32.totalorder %s34, 1
      %p52 = por %p50, %p51
      %p53 = scmp.ne.s32.totalorder %s42, %s43
      %p54 = scmp.eq.s32.totalorder %s34, 0
      %p55 = por %p53, %p54
      %p56 = scmp.ne.s32.totalorder %s42, %s43
      %p57 = scmp.eq.s32.totalorder %s35, 1
      %p58 = por %p56, %p57
      %p60 = scmp.ne.s32.totalorder %s43, %s59
      %p61 = scmp.eq.s32.totalorder %s35, 0
      %p62 = por %p60, %p61
      %s63 = ssub.s32 %s29, %s36
      %p64 = scmp.eq.s32.totalorder %s63, 0
      %s66 = sadd.s32 %s65, 1
      %s67 = scalar_select %p64, %s65, %s66
      %p70 = pneg %p64
      %p71 = scmp.eq.s32.totalorder %s29, 1
      %p72 = por %p70, %p71
      %p73 = scmp.ne.s32.totalorder %s65, %s68
      %p74 = scmp.eq.s32.totalorder %s29, 0
      %p75 = por %p73, %p74
      %p76 = scmp.ne.s32.totalorder %s65, %s68
      %p77 = scmp.eq.s32.totalorder %s34, 1
      %p78 = por %p76, %p77
      %p79 = scmp.ne.s32.totalorder %s68, %s69
      %p80 = scmp.eq.s32.totalorder %s34, 0
      %p81 = por %p79, %p80
      %p82 = scmp.ne.s32.totalorder %s68, %s69
      %p83 = scmp.eq.s32.totalorder %s35, 1
      %p84 = por %p82, %p83
      %p86 = scmp.ne.s32.totalorder %s69, %s85
      %p87 = scmp.eq.s32.totalorder %s35, 0
      %p88 = por %p86, %p87
      %s89 = ssub.s32 %s29, %s36
      %p90 = scmp.eq.s32.totalorder %s89, 0
      %s92 = sadd.s32 %s91, 1
      %s93 = scalar_select %p90, %s91, %s92
      %p96 = pneg %p90
      %p97 = scmp.eq.s32.totalorder %s29, 1
      %p98 = por %p96, %p97
      %p99 = scmp.ne.s32.totalorder %s91, %s94
      %p100 = scmp.eq.s32.totalorder %s29, 0
      %p101 = por %p99, %p100
      %p102 = scmp.ne.s32.totalorder %s91, %s94
      %p103 = scmp.eq.s32.totalorder %s34, 1
      %p104 = por %p102, %p103
      %p105 = scmp.ne.s32.totalorder %s94, %s95
      %p106 = scmp.eq.s32.totalorder %s34, 0
      %p107 = por %p105, %p106
      %p108 = scmp.ne.s32.totalorder %s94, %s95
      %p109 = scmp.eq.s32.totalorder %s35, 1
      %p110 = por %p108, %p109
      %p112 = scmp.ne.s32.totalorder %s95, %s111
      %p113 = scmp.eq.s32.totalorder %s35, 0
      %p114 = por %p112, %p113
      %s115 = ssub.s32 %s29, %s36
      %p116 = scmp.eq.s32.totalorder %s115, 0
      %s118 = sadd.s32 %s117, 1
      %s119 = scalar_select %p116, %s117, %s118
      %p122 = pneg %p116
      %p123 = scmp.eq.s32.totalorder %s29, 1
      %p124 = por %p122, %p123
      %p125 = scmp.ne.s32.totalorder %s117, %s120
      %p126 = scmp.eq.s32.totalorder %s29, 0
      %p127 = por %p125, %p126
      %p128 = scmp.ne.s32.totalorder %s117, %s120
      %p129 = scmp.eq.s32.totalorder %s34, 1
      %p130 = por %p128, %p129
      %p131 = scmp.ne.s32.totalorder %s120, %s121
      %p132 = scmp.eq.s32.totalorder %s34, 0
      %p133 = por %p131, %p132
      %p134 = scmp.ne.s32.totalorder %s120, %s121
      %p135 = scmp.eq.s32.totalorder %s35, 1
      %p136 = por %p134, %p135
      %p138 = scmp.ne.s32.totalorder %s121, %s137
      %p139 = scmp.eq.s32.totalorder %s35, 0
      %p140 = por %p138, %p139
      %s142 = sadd.s32 %s141, 1
      %p145 = scmp.eq.s32.totalorder %s29, 1
      %p146 = scmp.ne.s32.totalorder %s141, %s143
      %p147 = scmp.eq.s32.totalorder %s29, 0
      %p148 = por %p146, %p147
      %p149 = scmp.ne.s32.totalorder %s141, %s143
      %p150 = scmp.eq.s32.totalorder %s34, 1
      %p151 = por %p149, %p150
      %p152 = scmp.ne.s32.totalorder %s143, %s144
      %p153 = scmp.eq.s32.totalorder %s34, 0
      %p154 = por %p152, %p153
      %p155 = scmp.ne.s32.totalorder %s143, %s144
      %p156 = scmp.eq.s32.totalorder %s35, 1
      %p157 = por %p155, %p156
      %p159 = scmp.ne.s32.totalorder %s144, %s158
      %p160 = scmp.eq.s32.totalorder %s35, 0
      %p161 = por %p159, %p160
      %s163 = sadd.s32 %s162, 1
      %p166 = scmp.eq.s32.totalorder %s29, 1
      %p167 = scmp.ne.s32.totalorder %s162, %s164
      %p168 = scmp.eq.s32.totalorder %s29, 0
      %p169 = por %p167, %p168
      %p170 = scmp.ne.s32.totalorder %s162, %s164
      %p171 = scmp.eq.s32.totalorder %s34, 1
      %p172 = por %p170, %p171
      %p173 = scmp.ne.s32.totalorder %s164, %s165
      %p174 = scmp.eq.s32.totalorder %s34, 0
      %p175 = por %p173, %p174
      %p176 = scmp.ne.s32.totalorder %s164, %s165
      %p177 = scmp.eq.s32.totalorder %s35, 1
      %p178 = por %p176, %p177
      %p180 = scmp.ne.s32.totalorder %s165, %s179
      %p181 = scmp.eq.s32.totalorder %s35, 0
      %p182 = por %p180, %p181
      %s184 = sadd.s32 %s183, 1
      %p187 = scmp.eq.s32.totalorder %s29, 1
      %p188 = scmp.ne.s32.totalorder %s183, %s185
      %p189 = scmp.eq.s32.totalorder %s29, 0
      %p190 = por %p188, %p189
      %p191 = scmp.ne.s32.totalorder %s183, %s185
      %p192 = scmp.eq.s32.totalorder %s34, 1
      %p193 = por %p191, %p192
      %p194 = scmp.ne.s32.totalorder %s185, %s186
      %p195 = scmp.eq.s32.totalorder %s34, 0
      %p196 = por %p194, %p195
      %p197 = scmp.ne.s32.totalorder %s185, %s186
      %p198 = scmp.eq.s32.totalorder %s35, 1
      %p199 = por %p197, %p198
      %p201 = scmp.ne.s32.totalorder %s186, %s200
      %p202 = scmp.eq.s32.totalorder %s35, 0
      %p203 = por %p201, %p202
      %s205 = sadd.s32 %s204, 1
      %p208 = scmp.eq.s32.totalorder %s29, 1
      %p209 = scmp.ne.s32.totalorder %s204, %s206
      %p210 = scmp.eq.s32.totalorder %s29, 0
      %p211 = por %p209, %p210
      %p212 = scmp.ne.s32.totalorder %s204, %s206
      %p213 = scmp.eq.s32.totalorder %s34, 1
      %p214 = por %p212, %p213
      %p215 = scmp.ne.s32.totalorder %s206, %s207
      %p216 = scmp.eq.s32.totalorder %s34, 0
      %p217 = por %p215, %p216
      %p218 = scmp.ne.s32.totalorder %s206, %s207
      %p219 = scmp.eq.s32.totalorder %s35, 1
      %p220 = por %p218, %p219
      %p222 = scmp.ne.s32.totalorder %s207, %s221
      %p223 = scmp.eq.s32.totalorder %s35, 0
      %p224 = por %p222, %p223
      %s226 = sadd.s32 %s225, 1
      %p229 = scmp.eq.s32.totalorder %s29, 1
      %p230 = scmp.ne.s32.totalorder %s225, %s227
      %p231 = scmp.eq.s32.totalorder %s29, 0
      %p232 = por %p230, %p231
      %p233 = scmp.ne.s32.totalorder %s225, %s227
      %p234 = scmp.eq.s32.totalorder %s34, 1
      %p235 = por %p233, %p234
      %p236 = scmp.ne.s32.totalorder %s227, %s228
      %p237 = scmp.eq.s32.totalorder %s34, 0
      %p238 = por %p236, %p237
      %p239 = scmp.ne.s32.totalorder %s227, %s228
      %p240 = scmp.eq.s32.totalorder %s35, 1
      %p241 = por %p239, %p240
      %p243 = scmp.ne.s32.totalorder %s228, %s242
      %p244 = scmp.eq.s32.totalorder %s35, 0
      %p245 = por %p243, %p244
      %s247 = sadd.s32 %s246, 1
      %p250 = scmp.eq.s32.totalorder %s29, 1
      %p251 = scmp.ne.s32.totalorder %s246, %s248
      %p252 = scmp.eq.s32.totalorder %s29, 0
      %p253 = por %p251, %p252
      %p254 = scmp.ne.s32.totalorder %s246, %s248
      %p255 = scmp.eq.s32.totalorder %s34, 1
      %p256 = por %p254, %p255
      %p257 = scmp.ne.s32.totalorder %s248, %s249
      %p258 = scmp.eq.s32.totalorder %s34, 0
      %p259 = por %p257, %p258
      %p260 = scmp.ne.s32.totalorder %s248, %s249
      %p261 = scmp.eq.s32.totalorder %s35, 1
      %p262 = por %p260, %p261
      %p264 = scmp.ne.s32.totalorder %s249, %s263
      %p265 = scmp.eq.s32.totalorder %s35, 0
      %p266 = por %p264, %p265
      %s268 = sadd.s32 %s267, 1
      %p271 = scmp.eq.s32.totalorder %s29, 1
      %p272 = scmp.ne.s32.totalorder %s267, %s269
      %p273 = scmp.eq.s32.totalorder %s29, 0
      %p274 = por %p272, %p273
      %p275 = scmp.ne.s32.totalorder %s267, %s269
      %p276 = scmp.eq.s32.totalorder %s34, 1
      %p277 = por %p275, %p276
      %p278 = scmp.ne.s32.totalorder %s269, %s270
      %p279 = scmp.eq.s32.totalorder %s34, 0
      %p280 = por %p278, %p279
      %p281 = scmp.ne.s32.totalorder %s269, %s270
      %p282 = scmp.eq.s32.totalorder %s35, 1
      %p283 = por %p281, %p282
      %p285 = scmp.ne.s32.totalorder %s270, %s284
      %p286 = scmp.eq.s32.totalorder %s35, 0
      %p287 = por %p285, %p286
      %s289 = sadd.s32 %s288, 1
      %p292 = scmp.eq.s32.totalorder %s29, 1
      %p293 = scmp.ne.s32.totalorder %s288, %s290
      %p294 = scmp.eq.s32.totalorder %s29, 0
      %p295 = por %p293, %p294
      %p296 = scmp.ne.s32.totalorder %s288, %s290
      %p297 = scmp.eq.s32.totalorder %s34, 1
      %p298 = por %p296, %p297
      %p299 = scmp.ne.s32.totalorder %s290, %s291
      %p300 = scmp.eq.s32.totalorder %s34, 0
      %p301 = por %p299, %p300
      %p302 = scmp.ne.s32.totalorder %s290, %s291
      %p303 = scmp.eq.s32.totalorder %s35, 1
      %p304 = por %p302, %p303
      %p306 = scmp.ne.s32.totalorder %s291, %s305
      %p307 = scmp.eq.s32.totalorder %s35, 0
      %p308 = por %p306, %p307
      %s309 = ssub.s32 %s29, %s36
      %p310 = scmp.eq.s32.totalorder %s309, 0
      %s312 = sadd.s32 %s311, 1
      %s313 = scalar_select %p310, %s311, %s312
      %p316 = pneg %p310
      %p317 = scmp.eq.s32.totalorder %s29, 1
      %p318 = por %p316, %p317
      %p319 = scmp.ne.s32.totalorder %s311, %s314
      %p320 = scmp.eq.s32.totalorder %s29, 0
      %p321 = por %p319, %p320
      %p322 = scmp.ne.s32.totalorder %s311, %s314
      %p323 = scmp.eq.s32.totalorder %s34, 1
      %p324 = por %p322, %p323
      %p325 = scmp.ne.s32.totalorder %s314, %s315
      %p326 = scmp.eq.s32.totalorder %s34, 0
      %p327 = por %p325, %p326
      %p328 = scmp.ne.s32.totalorder %s314, %s315
      %p329 = scmp.eq.s32.totalorder %s35, 1
      %p330 = por %p328, %p329
      %p332 = scmp.ne.s32.totalorder %s315, %s331
      %p333 = scmp.eq.s32.totalorder %s35, 0
      %p334 = por %p332, %p333
      %p335 = scmp.le.s32.totalorder 1, %s29
      %p336 = scmp.lt.s32.totalorder %s29, 3
      %p337 = pnand %p335, %p336
      %p338 = pneg %p337
      // Predicated region
      $region9: #{tpu_custom_call.1} parent=5 // pred_check
        _
      $region10: #{tpu_custom_call.1} parent=5 // pred_check_branch
        %340 = sbr.rel (%p337) target = $region12
      $region11: #{tpu_custom_call.1} parent=5 // pred_region
        %s341 = ssub.s32 %s29, 1
        // Predicated region
        $region13: #{tpu_custom_call.1} parent=11 // pred_check
          %p342 = pneg %p154
        $region14: #{tpu_custom_call.1} parent=11 // pred_check_branch
          %344 = sbr.rel (%p342) target = $region16
        $region15: #{tpu_custom_call.1} parent=11 // pred_region
          _
        $region16: #{tpu_custom_call.1} parent=11 // pred_fallthru
          _
        // Predicated region
        $region17: #{tpu_custom_call.1} parent=11 // pred_check
          %p345 = pneg %p175
        $region18: #{tpu_custom_call.1} parent=11 // pred_check_branch
          %347 = sbr.rel (%p345) target = $region20
        $region19: #{tpu_custom_call.1} parent=11 // pred_region
          _
        $region20: #{tpu_custom_call.1} parent=11 // pred_fallthru
          _
        // Predicated region
        $region21: #{tpu_custom_call.1} parent=11 // pred_check
          %p348 = pneg %p196
        $region22: #{tpu_custom_call.1} parent=11 // pred_check_branch
          %350 = sbr.rel (%p348) target = $region24
        $region23: #{tpu_custom_call.1} parent=11 // pred_region
          %s352 = ssub.s32 512, 512
          %353 = vsyncadd [#allocation13], %s352
          %s354 = sshll.u32 [#allocation12], 4
          %s355 = int_to_ptr.vmem [resolvable:$true] %s354
          %360 = dma.hbm_to_vmem [thread:$0]  %s6, 512, %s355, [#allocation13], 128, 128, 8
        $region24: #{tpu_custom_call.1} parent=11 // pred_fallthru
          _
        // Predicated region
        $region25: #{tpu_custom_call.1} parent=11 // pred_check
          %p361 = pneg %p217
        $region26: #{tpu_custom_call.1} parent=11 // pred_check_branch
          %363 = sbr.rel (%p361) target = $region28
        $region27: #{tpu_custom_call.1} parent=11 // pred_region
          _
        $region28: #{tpu_custom_call.1} parent=11 // pred_fallthru
          _
        // Predicated region
        $region29: #{tpu_custom_call.1} parent=11 // pred_check
          %p364 = pneg %p238
        $region30: #{tpu_custom_call.1} parent=11 // pred_check_branch
          %366 = sbr.rel (%p364) target = $region32
        $region31: #{tpu_custom_call.1} parent=11 // pred_region
          %s368 = ssub.s32 512, 512
          %369 = vsyncadd [#allocation13], %s368
          %s370 = sshll.u32 [#allocation14], 4
          %s371 = int_to_ptr.vmem [resolvable:$true] %s370
          %376 = dma.hbm_to_vmem [thread:$0]  %s8, 512, %s371, [#allocation13], 128, 128, 8
        $region32: #{tpu_custom_call.1} parent=11 // pred_fallthru
          _
        // Predicated region
        $region33: #{tpu_custom_call.1} parent=11 // pred_check
          %p377 = pneg %p259
        $region34: #{tpu_custom_call.1} parent=11 // pred_check_branch
          %379 = sbr.rel (%p377) target = $region36
        $region35: #{tpu_custom_call.1} parent=11 // pred_region
          _
        $region36: #{tpu_custom_call.1} parent=11 // pred_fallthru
          _
        // Predicated region
        $region37: #{tpu_custom_call.1} parent=11 // pred_check
          %p380 = pneg %p280
        $region38: #{tpu_custom_call.1} parent=11 // pred_check_branch
          %382 = sbr.rel (%p380) target = $region40
        $region39: #{tpu_custom_call.1} parent=11 // pred_region
          %s384 = ssub.s32 512, 512
          %385 = vsyncadd [#allocation16], %s384
          %s386 = sshll.u32 [#allocation15], 4
          %s387 = int_to_ptr.vmem [resolvable:$true] %s386
          %392 = dma.hbm_to_vmem [thread:$0]  %s10, 512, %s387, [#allocation16], 128, 128, 8
        $region40: #{tpu_custom_call.1} parent=11 // pred_fallthru
          _
        // Predicated region
        $region41: #{tpu_custom_call.1} parent=11 // pred_check
          %p393 = pneg %p301
        $region42: #{tpu_custom_call.1} parent=11 // pred_check_branch
          %395 = sbr.rel (%p393) target = $region44
        $region43: #{tpu_custom_call.1} parent=11 // pred_region
          _
        $region44: #{tpu_custom_call.1} parent=11 // pred_fallthru
          _
      $region12: #{tpu_custom_call.1} parent=5 // pred_fallthru
        _
      %p396 = scmp.lt.s32.totalorder %s29, 2
      // Predicated region
      $region45: #{tpu_custom_call.1} parent=5 // pred_check
        %p397 = pneg %p396
      $region46: #{tpu_custom_call.1} parent=5 // pred_check_branch
        %399 = sbr.rel (%p397) target = $region48
      $region47: #{tpu_custom_call.1} parent=5 // pred_region
        // Predicated region
        $region49: #{tpu_custom_call.1} parent=47 // pred_check
          %p400 = pneg %p49
        $region50: #{tpu_custom_call.1} parent=47 // pred_check_branch
          %402 = sbr.rel (%p400) target = $region52
        $region51: #{tpu_custom_call.1} parent=47 // pred_region
          %s403 = sand.u32 %s39, 1
          %s404 = scalar_lea.sflag [#allocation7], %s403
          %s405 = sand.u32 %s39, 1
          %s406 = smul.addr %s405, 8
          %s407 = scalar_lea.vmem [#allocation6], %s406
          %s409 = ssub.s32 128, 128
          %410 = vsyncadd %s404, %s409
          %s411 = smul.addr %s29, 128
          %s412 = scalar_lea.hbm %s0, %s411
          %s414 = sshll.u32 %s407, 4
          %s415 = int_to_ptr.vmem [resolvable:$true] %s414
          %417 = dma.hbm_to_vmem [thread:$0]  %s412, 128, %s415, %s404
        $region52: #{tpu_custom_call.1} parent=47 // pred_fallthru
          _
        // Predicated region
        $region53: #{tpu_custom_call.1} parent=47 // pred_check
          %p418 = pneg %p75
        $region54: #{tpu_custom_call.1} parent=47 // pred_check_branch
          %420 = sbr.rel (%p418) target = $region56
        $region55: #{tpu_custom_call.1} parent=47 // pred_region
          %s421 = sand.u32 %s29, 1
          %s422 = scalar_lea.sflag [#allocation10], %s421
          %s423 = sand.u32 %s65, 1
          %s424 = smul.addr %s423, 16
          %s425 = scalar_lea.vmem [#allocation9], %s424
          %s426 = smul.u32 2, %s29
          %s428 = ssub.s32 256, 256
          %429 = vsyncadd %s422, %s428
          %s430 = smul.addr %s426, 128
          %s431 = scalar_lea.hbm %s1, %s430
          %s432 = sshll.u32 %s425, 4
          %s433 = int_to_ptr.vmem [resolvable:$true] %s432
          %438 = dma.hbm_to_vmem [thread:$0]  %s431, 256, %s433, %s422, 128, 128, 8
        $region56: #{tpu_custom_call.1} parent=47 // pred_fallthru
          _
        // Predicated region
        $region57: #{tpu_custom_call.1} parent=47 // pred_check
          %p439 = pneg %p101
        $region58: #{tpu_custom_call.1} parent=47 // pred_check_branch
          %441 = sbr.rel (%p439) target = $region60
        $region59: #{tpu_custom_call.1} parent=47 // pred_region
          %p442 = scmp.lt.s32.totalorder %s29, 1
          %s443 = scalar_select %p442, %s29, 1
          %s444 = smul.addr %s443, 8
          %s445 = scalar_lea.vmem %s2, %s444
        $region60: #{tpu_custom_call.1} parent=47 // pred_fallthru
          _
        // Predicated region
        $region61: #{tpu_custom_call.1} parent=47 // pred_check
          %p446 = pneg %p127
        $region62: #{tpu_custom_call.1} parent=47 // pred_check_branch
          %448 = sbr.rel (%p446) target = $region64
        $region63: #{tpu_custom_call.1} parent=47 // pred_region
          %s449 = sand.u32 %s29, 1
          %s450 = scalar_lea.sflag [#allocation10], %s449
          %s451 = sand.u32 %s117, 1
          %s452 = scalar_lea.vmem [#allocation11], %s451
          %s454 = ssub.s32 16, 16
          %455 = vsyncadd %s450, %s454
          %s456 = smul.addr %s29, 16
          %s457 = scalar_lea.hbm %s3, %s456
          %s459 = sshll.u32 %s452, 4
          %s460 = int_to_ptr.vmem [resolvable:$true] %s459
          %462 = dma.hbm_to_vmem [thread:$0]  %s457, 16, %s460, %s450
        $region64: #{tpu_custom_call.1} parent=47 // pred_fallthru
          _
      $region48: #{tpu_custom_call.1} parent=5 // pred_fallthru
        _
      %p463 = scmp.le.s32.totalorder 1, %s29
      %p464 = scmp.lt.s32.totalorder %s29, 3
      %p465 = pnand %p463, %p464
      %p466 = pneg %p465
      // Predicated region
      $region65: #{tpu_custom_call.1} parent=5 // pred_check
        _
      $region66: #{tpu_custom_call.1} parent=5 // pred_check_branch
        %468 = sbr.rel (%p465) target = $region68
      $region67: #{tpu_custom_call.1} parent=5 // pred_region
        %s469 = ssub.s32 %s29, 1
        %s470 = sand.u32 %s42, 1
        %s471 = scalar_lea.sflag [#allocation7], %s470
        %s472 = sand.u32 %s42, 1
        %s473 = smul.addr %s472, 8
        %s474 = scalar_lea.vmem [#allocation6], %s473
        // Predicated region
        $region69: #{tpu_custom_call.1} parent=67 // pred_check
          %p475 = pneg %p55
        $region70: #{tpu_custom_call.1} parent=67 // pred_check_branch
          %477 = sbr.rel (%p475) target = $region72
        $region71: #{tpu_custom_call.1} parent=67 // pred_region
          %478 = dma.done %s471, 128
        $region72: #{tpu_custom_call.1} parent=67 // pred_fallthru
          _
        %s479 = sand.u32 %s34, 1
        %s480 = scalar_lea.sflag [#allocation10], %s479
        %s481 = sand.u32 %s68, 1
        %s482 = smul.addr %s481, 16
        %s483 = scalar_lea.vmem [#allocation9], %s482
        // Predicated region
        $region73: #{tpu_custom_call.1} parent=67 // pred_check
          %p484 = pneg %p81
        $region74: #{tpu_custom_call.1} parent=67 // pred_check_branch
          %486 = sbr.rel (%p484) target = $region76
        $region75: #{tpu_custom_call.1} parent=67 // pred_region
          %487 = dma.done %s480, 256
        $region76: #{tpu_custom_call.1} parent=67 // pred_fallthru
          _
        %s488 = sand.u32 %s34, 1
        %s489 = scalar_lea.sflag [#allocation10], %s488
        %s490 = sand.u32 %s120, 1
        %s491 = scalar_lea.vmem [#allocation11], %s490
        // Predicated region
        $region77: #{tpu_custom_call.1} parent=67 // pred_check
          %p492 = pneg %p133
        $region78: #{tpu_custom_call.1} parent=67 // pred_check_branch
          %494 = sbr.rel (%p492) target = $region80
        $region79: #{tpu_custom_call.1} parent=67 // pred_region
          %495 = dma.done %s489, 16
        $region80: #{tpu_custom_call.1} parent=67 // pred_fallthru
          _
        // Predicated region
        $region81: #{tpu_custom_call.1} parent=67 // pred_check
          %p496 = pneg %p196
        $region82: #{tpu_custom_call.1} parent=67 // pred_check_branch
          %498 = sbr.rel (%p496) target = $region84
        $region83: #{tpu_custom_call.1} parent=67 // pred_region
          %499 = dma.done [#allocation13], 512
        $region84: #{tpu_custom_call.1} parent=67 // pred_fallthru
          _
        // Predicated region
        $region85: #{tpu_custom_call.1} parent=67 // pred_check
          %p500 = pneg %p238
        $region86: #{tpu_custom_call.1} parent=67 // pred_check_branch
          %502 = sbr.rel (%p500) target = $region88
        $region87: #{tpu_custom_call.1} parent=67 // pred_region
          %503 = dma.done [#allocation13], 512
        $region88: #{tpu_custom_call.1} parent=67 // pred_fallthru
          _
        // Predicated region
        $region89: #{tpu_custom_call.1} parent=67 // pred_check
          %p504 = pneg %p280
        $region90: #{tpu_custom_call.1} parent=67 // pred_check_branch
          %506 = sbr.rel (%p504) target = $region92
        $region91: #{tpu_custom_call.1} parent=67 // pred_region
          %507 = dma.done [#allocation16], 512
        $region92: #{tpu_custom_call.1} parent=67 // pred_fallthru
          _
        %s508 = sand.u32 %s42, 1
        %s509 = scalar_lea.sflag [#allocation7], %s508
        %s510 = sand.u32 %s42, 1
        %s511 = smul.addr %s510, 8
        %s512 = scalar_lea.vmem [#allocation6], %s511
        %p513 = pneg %p55
        %p514 = pneg %p52
        %s515 = sand.u32 %s34, 1
        %s516 = scalar_lea.sflag [#allocation10], %s515
        %s517 = sand.u32 %s68, 1
        %s518 = smul.addr %s517, 16
        %s519 = scalar_lea.vmem [#allocation9], %s518
        %p520 = pneg %p81
        %p521 = pneg %p78
        %p522 = scmp.lt.s32.totalorder %s34, 1
        %s523 = scalar_select %p522, %s34, 1
        %s524 = smul.addr %s523, 8
        %s525 = scalar_lea.vmem %s2, %s524
        %p526 = pneg %p107
        %p527 = pneg %p104
        %s528 = sand.u32 %s34, 1
        %s529 = scalar_lea.sflag [#allocation10], %s528
        %s530 = sand.u32 %s120, 1
        %s531 = scalar_lea.vmem [#allocation11], %s530
        %p532 = pneg %p133
        %p533 = pneg %p130
        %p534 = pneg %p154
        %p535 = pneg %p151
        %p536 = pneg %p175
        %p537 = pneg %p172
        %p538 = pneg %p196
        %p539 = pneg %p193
        %p540 = pneg %p217
        %p541 = pneg %p214
        %p542 = pneg %p238
        %p543 = pneg %p235
        %p544 = pneg %p259
        %p545 = pneg %p256
        %p546 = pneg %p280
        %p547 = pneg %p277
        %p548 = pneg %p301
        %p549 = pneg %p298
        %p550 = pneg %p327
        %p551 = pneg %p324
        %s552 = sand.u32 %s314, 1
        %s553 = scalar_lea.sflag [#allocation8], %s552
        %s554 = sand.u32 %s314, 1
        %s555 = smul.addr %s554, 8
        %s556 = scalar_lea.vmem [#allocation17], %s555
        %s557 = smul.u32 2, %s34
        %p558 = scmp.lt.s32.totalorder %s34, 1
        %s559 = scalar_select %p558, %s34, 1
        %s560 = smul.addr %s559, 8
        %s561 = scalar_lea.vmem %s2, %s560
        %v562 = vld [vmem:[%s474] sm:$0xff]
        %v563 = vld [vmem:[%s483] sm:$0xff]
        %v564 = vld [vmem:[%s483 + $0x8] sm:$0xff]
        %v565 = vld [vmem:[%s4] sm:$0xff]
        %v566 = vld [vmem:[%s4 + $0x8] sm:$0xff]
        %v567 = vld [vmem:[%s4 + $0x10] sm:$0xff]
        %v568 = vld [vmem:[%s4 + $0x18] sm:$0xff]
        %v569 = vld [vmem:[%s5] sm:$0x1]
        %v571 = vlaneseq
        %v572 = vshrl.u32 %v571, 7
        %v573 = vsub.s32 0, %v572
        %v574 = vrot.slane %v569, %v573
        %vm576 = vcmask 261120
        %v578 = vsel %vm576, %v562, 0
        %580 = vmatprep.subr.mxu0 0.0
        %581 = vmatpush1.msra.mxu0 %v565
        %582 = vmatprep.subr.mxu0 0.0
        %583 = vmatpush1.msra.mxu0 %v566
        %584 = vmatprep.subr.mxu0 0.0
        %585 = vmatpush1.msra.mxu0 %v567
        %586 = vmatprep.subr.mxu0 0.0
        %587 = vmatpush1.msra.mxu0 %v568
        %588 = vmatprep.subr.mxu0 0.0
        %589 = vmatpush1.msra.mxu0 0.0
        %590 = vmatprep.subr.mxu0 0.0
        %591 = vmatpush1.msra.mxu0 0.0
        %592 = vmatprep.subr.mxu0 0.0
        %593 = vmatpush1.msra.mxu0 0.0
        %594 = vmatprep.subr.mxu0 0.0
        %595 = vmatpush1.msra.mxu0 0.0
        %596 = vmatprep.subr.mxu0 0.0
        %597 = vmatpush1.msra.mxu0 0.0
        %598 = vmatprep.subr.mxu0 0.0
        %599 = vmatpush1.msra.mxu0 0.0
        %600 = vmatprep.subr.mxu0 0.0
        %601 = vmatpush1.msra.mxu0 0.0
        %602 = vmatprep.subr.mxu0 0.0
        %603 = vmatpush1.msra.mxu0 0.0
        %604 = vmatprep.subr.mxu0 0.0
        %605 = vmatpush1.msra.mxu0 0.0
        %606 = vmatprep.subr.mxu0 0.0
        %607 = vmatpush1.msra.mxu0 0.0
        %608 = vmatprep.subr.mxu0 0.0
        %609 = vmatpush1.msra.mxu0 0.0
        %610 = vmatprep.subr.mxu0 0.0
        %611 = vmatpush1.msra.mxu0 0.0
        %612 = vmatprep.subr.mxu0 0.0
        %613 = vmatpush1.msra.mxu0 0.0
        %614 = vmatprep.subr.mxu0 0.0
        %615 = vmatpush1.msra.mxu0 0.0
        %616 = vmatprep.subr.mxu0 0.0
        %617 = vmatpush1.msra.mxu0 0.0
        %618 = vmatprep.subr.mxu0 0.0
        %619 = vmatpush1.msra.mxu0 0.0
        %620 = vmatprep.subr.mxu0 0.0
        %621 = vmatpush1.msra.mxu0 0.0
        %622 = vmatprep.subr.mxu0 0.0
        %623 = vmatpush1.msra.mxu0 0.0
        %624 = vmatprep.subr.mxu0 0.0
        %625 = vmatpush1.msra.mxu0 0.0
        %626 = vmatprep.subr.mxu0 0.0
        %627 = vmatpush1.msra.mxu0 0.0
        %628 = vmatprep.subr.mxu0 0.0
        %629 = vmatpush1.msra.mxu0 0.0
        %630 = vmatprep.subr.mxu0 0.0
        %631 = vmatpush1.msra.mxu0 0.0
        %632 = vmatprep.subr.mxu0 0.0
        %633 = vmatpush1.msra.mxu0 0.0
        %634 = vmatprep.subr.mxu0 0.0
        %635 = vmatpush1.msra.mxu0 0.0
        %636 = vmatprep.subr.mxu0 0.0
        %637 = vmatpush1.msra.mxu0 0.0
        %638 = vmatprep.subr.mxu0 0.0
        %639 = vmatpush1.msra.mxu0 0.0
        %640 = vmatprep.subr.mxu0 0.0
        %641 = vmatpush1.msra.mxu0 0.0
        %642 = vmatprep.subr.mxu0 0.0
        %643 = vmatpush1.msra.mxu0 0.0
        %644 = vmatprep.mubr.f32.mxu0 0.0
        %645 = vmatmul.mubr.f32.gmra.mrb[0].mxu0 %v578
        %v646 = vpop.f32.mrb[0].mxu0
        %v647 = vadd.f32 %v574, %v646
        %v648 = vpop.f32.mrb[0].mxu0
        %649 = vdwg.mxu0
        %v650 = vld [vmem:[#allocation12] sm:$0xff]
        %v651 = vld [vmem:[#allocation12 + $0x8] sm:$0xff]
        %v652 = vld [vmem:[#allocation12 + $0x10] sm:$0xff]
        %v653 = vld [vmem:[#allocation12 + $0x18] sm:$0xff]
        %v654 = vld [vmem:[%s7] sm:$0x1]
        %v656 = vlaneseq
        %v657 = vshrl.u32 %v656, 7
        %v658 = vsub.s32 0, %v657
        %v659 = vrot.slane %v654, %v658
        %v662 = vsel %vm576, %v563, 0
        %v665 = vsel %vm576, %v564, 0
        %667 = vmatprep.subr.mxu0 0.0
        %668 = vmatpush1.msra.mxu0 %v650
        %669 = vmatprep.subr.mxu0 0.0
        %670 = vmatpush1.msra.mxu0 %v651
        %671 = vmatprep.subr.mxu0 0.0
        %672 = vmatpush1.msra.mxu0 %v652
        %673 = vmatprep.subr.mxu0 0.0
        %674 = vmatpush1.msra.mxu0 %v653
        %675 = vmatprep.subr.mxu0 0.0
        %676 = vmatpush1.msra.mxu0 0.0
        %677 = vmatprep.subr.mxu0 0.0
        %678 = vmatpush1.msra.mxu0 0.0
        %679 = vmatprep.subr.mxu0 0.0
        %680 = vmatpush1.msra.mxu0 0.0
        %681 = vmatprep.subr.mxu0 0.0
        %682 = vmatpush1.msra.mxu0 0.0
        %683 = vmatprep.subr.mxu0 0.0
        %684 = vmatpush1.msra.mxu0 0.0
        %685 = vmatprep.subr.mxu0 0.0
        %686 = vmatpush1.msra.mxu0 0.0
        %687 = vmatprep.subr.mxu0 0.0
        %688 = vmatpush1.msra.mxu0 0.0
        %689 = vmatprep.subr.mxu0 0.0
        %690 = vmatpush1.msra.mxu0 0.0
        %691 = vmatprep.subr.mxu0 0.0
        %692 = vmatpush1.msra.mxu0 0.0
        %693 = vmatprep.subr.mxu0 0.0
        %694 = vmatpush1.msra.mxu0 0.0
        %695 = vmatprep.subr.mxu0 0.0
        %696 = vmatpush1.msra.mxu0 0.0
        %697 = vmatprep.subr.mxu0 0.0
        %698 = vmatpush1.msra.mxu0 0.0
        %699 = vmatprep.subr.mxu0 0.0
        %700 = vmatpush1.msra.mxu0 0.0
        %701 = vmatprep.subr.mxu0 0.0
        %702 = vmatpush1.msra.mxu0 0.0
        %703 = vmatprep.subr.mxu0 0.0
        %704 = vmatpush1.msra.mxu0 0.0
        %705 = vmatprep.subr.mxu0 0.0
        %706 = vmatpush1.msra.mxu0 0.0
        %707 = vmatprep.subr.mxu0 0.0
        %708 = vmatpush1.msra.mxu0 0.0
        %709 = vmatprep.subr.mxu0 0.0
        %710 = vmatpush1.msra.mxu0 0.0
        %711 = vmatprep.subr.mxu0 0.0
        %712 = vmatpush1.msra.mxu0 0.0
        %713 = vmatprep.subr.mxu0 0.0
        %714 = vmatpush1.msra.mxu0 0.0
        %715 = vmatprep.subr.mxu0 0.0
        %716 = vmatpush1.msra.mxu0 0.0
        %717 = vmatprep.subr.mxu0 0.0
        %718 = vmatpush1.msra.mxu0 0.0
        %719 = vmatprep.subr.mxu0 0.0
        %720 = vmatpush1.msra.mxu0 0.0
        %721 = vmatprep.subr.mxu0 0.0
        %722 = vmatpush1.msra.mxu0 0.0
        %723 = vmatprep.subr.mxu0 0.0
        %724 = vmatpush1.msra.mxu0 0.0
        %725 = vmatprep.subr.mxu0 0.0
        %726 = vmatpush1.msra.mxu0 0.0
        %727 = vmatprep.subr.mxu0 0.0
        %728 = vmatpush1.msra.mxu0 0.0
        %729 = vmatprep.subr.mxu0 0.0
        %730 = vmatpush1.msra.mxu0 0.0
        %731 = vmatprep.mubr.f32.mxu0 0.0
        %732 = vmatmul.mubr.f32.gmra.mrb[0].mxu0 %v662
        %v733 = vpop.f32.mrb[0].mxu0
        %v734 = vadd.f32 %v659, %v733
        %v735 = vpop.f32.mrb[0].mxu0
        %736 = vmatprep.mubr.f32.mxu0 0.0
        %737 = vmatmul.mubr.f32.gmra.mrb[0].mxu0 %v665
        %v738 = vpop.f32.mrb[0].mxu0
        %v739 = vadd.f32 %v659, %v738
        %v740 = vpop.f32.mrb[0].mxu0
        %741 = vdwg.mxu0
        %v742 = vld [vmem:[#allocation14] sm:$0xff]
        %v743 = vld [vmem:[#allocation14 + $0x8] sm:$0xff]
        %v744 = vld [vmem:[#allocation14 + $0x10] sm:$0xff]
        %v745 = vld [vmem:[#allocation14 + $0x18] sm:$0xff]
        %v746 = vld [vmem:[%s9] sm:$0x1]
        %v748 = vlaneseq
        %v749 = vshrl.u32 %v748, 7
        %v750 = vsub.s32 0, %v749
        %v751 = vrot.slane %v746, %v750
        %753 = vmatprep.subr.mxu0 0.0
        %754 = vmatpush1.msra.mxu0 %v742
        %755 = vmatprep.subr.mxu0 0.0
        %756 = vmatpush1.msra.mxu0 %v743
        %757 = vmatprep.subr.mxu0 0.0
        %758 = vmatpush1.msra.mxu0 %v744
        %759 = vmatprep.subr.mxu0 0.0
        %760 = vmatpush1.msra.mxu0 %v745
        %761 = vmatprep.subr.mxu0 0.0
        %762 = vmatpush1.msra.mxu0 0.0
        %763 = vmatprep.subr.mxu0 0.0
        %764 = vmatpush1.msra.mxu0 0.0
        %765 = vmatprep.subr.mxu0 0.0
        %766 = vmatpush1.msra.mxu0 0.0
        %767 = vmatprep.subr.mxu0 0.0
        %768 = vmatpush1.msra.mxu0 0.0
        %769 = vmatprep.subr.mxu0 0.0
        %770 = vmatpush1.msra.mxu0 0.0
        %771 = vmatprep.subr.mxu0 0.0
        %772 = vmatpush1.msra.mxu0 0.0
        %773 = vmatprep.subr.mxu0 0.0
        %774 = vmatpush1.msra.mxu0 0.0
        %775 = vmatprep.subr.mxu0 0.0
        %776 = vmatpush1.msra.mxu0 0.0
        %777 = vmatprep.subr.mxu0 0.0
        %778 = vmatpush1.msra.mxu0 0.0
        %779 = vmatprep.subr.mxu0 0.0
        %780 = vmatpush1.msra.mxu0 0.0
        %781 = vmatprep.subr.mxu0 0.0
        %782 = vmatpush1.msra.mxu0 0.0
        %783 = vmatprep.subr.mxu0 0.0
        %784 = vmatpush1.msra.mxu0 0.0
        %785 = vmatprep.subr.mxu0 0.0
        %786 = vmatpush1.msra.mxu0 0.0
        %787 = vmatprep.subr.mxu0 0.0
        %788 = vmatpush1.msra.mxu0 0.0
        %789 = vmatprep.subr.mxu0 0.0
        %790 = vmatpush1.msra.mxu0 0.0
        %791 = vmatprep.subr.mxu0 0.0
        %792 = vmatpush1.msra.mxu0 0.0
        %793 = vmatprep.subr.mxu0 0.0
        %794 = vmatpush1.msra.mxu0 0.0
        %795 = vmatprep.subr.mxu0 0.0
        %796 = vmatpush1.msra.mxu0 0.0
        %797 = vmatprep.subr.mxu0 0.0
        %798 = vmatpush1.msra.mxu0 0.0
        %799 = vmatprep.subr.mxu0 0.0
        %800 = vmatpush1.msra.mxu0 0.0
        %801 = vmatprep.subr.mxu0 0.0
        %802 = vmatpush1.msra.mxu0 0.0
        %803 = vmatprep.subr.mxu0 0.0
        %804 = vmatpush1.msra.mxu0 0.0
        %805 = vmatprep.subr.mxu0 0.0
        %806 = vmatpush1.msra.mxu0 0.0
        %807 = vmatprep.subr.mxu0 0.0
        %808 = vmatpush1.msra.mxu0 0.0
        %809 = vmatprep.subr.mxu0 0.0
        %810 = vmatpush1.msra.mxu0 0.0
        %811 = vmatprep.subr.mxu0 0.0
        %812 = vmatpush1.msra.mxu0 0.0
        %813 = vmatprep.subr.mxu0 0.0
        %814 = vmatpush1.msra.mxu0 0.0
        %815 = vmatprep.subr.mxu0 0.0
        %816 = vmatpush1.msra.mxu0 0.0
        %817 = vmatprep.mubr.f32.mxu0 0.0
        %818 = vmatmul.mubr.f32.gmra.mrb[0].mxu0 %v662
        %v819 = vpop.f32.mrb[0].mxu0
        %v820 = vadd.f32 %v751, %v819
        %v821 = vpop.f32.mrb[0].mxu0
        %822 = vmatprep.mubr.f32.mxu0 0.0
        %823 = vmatmul.mubr.f32.gmra.mrb[0].mxu0 %v665
        %v824 = vpop.f32.mrb[0].mxu0
        %v825 = vadd.f32 %v751, %v824
        %v826 = vpop.f32.mrb[0].mxu0
        %827 = vdwg.mxu0
        %828 = vst.msk [vmem:[#allocation2] sm:$0xff] %vm576, %v647
        %829 = vst.msk [vmem:[#allocation3] sm:$0xff] %vm576, %v734
        %830 = vst.msk [vmem:[#allocation3 + $0x8] sm:$0xff] %vm576, %v739
        %831 = vst.msk [vmem:[#allocation4] sm:$0xff] %vm576, %v820
        %832 = vst.msk [vmem:[#allocation4 + $0x8] sm:$0xff] %vm576, %v825
        %v833 = vld [vmem:[#allocation2] sm:$0xff]
        %v834 = vld [vmem:[#allocation3] sm:$0xff]
        %v835 = vld [vmem:[#allocation3 + $0x8] sm:$0xff]
        %v836 = vld [vmem:[#allocation4] sm:$0xff]
        %v837 = vld [vmem:[#allocation4 + $0x8] sm:$0xff]
        %v838 = vld [vmem:[%s561] sm:$0xff]
        %v839 = vld [vmem:[%s491] sm:$0x1]
        %841 = vset.pattern.permute.xlu0 0
        %842 = vperm.xlu0 %841, %v838
        %v843 = vpop.permute.xlu0 %842
        %v846 = vlaneseq
        %v847 = vshrl.u32 %v846, 7
        %v848 = vsub.s32 0, %v847
        %v849 = vrot.slane %v839, %v848
        %v851 = vmul.f32 %v843, %v849
        %v852 = vsub.f32 1.0, %v851
        %v853 = vmul.f32 %v852, -10000.0
        %vm854 = vcmask 64512
        %v856 = vsel %vm854, %v833, 0
        %v859 = vsel %vm854, %v834, 0
        %v862 = vsel %vm854, %v835, 0
        %864 = vmatprep.subr.mxu0 0.0
        %865 = vmatpush1.xpose.msra.mxu0 %v859
        %866 = vmatprep.subr.mxu0 0.0
        %867 = vmatpush1.xpose.msra.mxu0 %v862
        %868 = vmatprep.subr.mxu0 0.0
        %869 = vmatpush1.xpose.msra.mxu0 0.0
        %870 = vmatprep.subr.mxu0 0.0
        %871 = vmatpush1.xpose.msra.mxu0 0.0
        %872 = vmatprep.subr.mxu0 0.0
        %873 = vmatpush1.xpose.msra.mxu0 0.0
        %874 = vmatprep.subr.mxu0 0.0
        %875 = vmatpush1.xpose.msra.mxu0 0.0
        %876 = vmatprep.subr.mxu0 0.0
        %877 = vmatpush1.xpose.msra.mxu0 0.0
        %878 = vmatprep.subr.mxu0 0.0
        %879 = vmatpush1.xpose.msra.mxu0 0.0
        %880 = vmatprep.subr.mxu0 0.0
        %881 = vmatpush1.xpose.msra.mxu0 0.0
        %882 = vmatprep.subr.mxu0 0.0
        %883 = vmatpush1.xpose.msra.mxu0 0.0
        %884 = vmatprep.subr.mxu0 0.0
        %885 = vmatpush1.xpose.msra.mxu0 0.0
        %886 = vmatprep.subr.mxu0 0.0
        %887 = vmatpush1.xpose.msra.mxu0 0.0
        %888 = vmatprep.subr.mxu0 0.0
        %889 = vmatpush1.xpose.msra.mxu0 0.0
        %890 = vmatprep.subr.mxu0 0.0
        %891 = vmatpush1.xpose.msra.mxu0 0.0
        %892 = vmatprep.subr.mxu0 0.0
        %893 = vmatpush1.xpose.msra.mxu0 0.0
        %894 = vmatprep.subr.mxu0 0.0
        %895 = vmatpush1.xpose.msra.mxu0 0.0
        %896 = vmatprep.subr.mxu0 0.0
        %897 = vmatpush1.xpose.msra.mxu0 0.0
        %898 = vmatprep.subr.mxu0 0.0
        %899 = vmatpush1.xpose.msra.mxu0 0.0
        %900 = vmatprep.subr.mxu0 0.0
        %901 = vmatpush1.xpose.msra.mxu0 0.0
        %902 = vmatprep.subr.mxu0 0.0
        %903 = vmatpush1.xpose.msra.mxu0 0.0
        %904 = vmatprep.subr.mxu0 0.0
        %905 = vmatpush1.xpose.msra.mxu0 0.0
        %906 = vmatprep.subr.mxu0 0.0
        %907 = vmatpush1.xpose.msra.mxu0 0.0
        %908 = vmatprep.subr.mxu0 0.0
        %909 = vmatpush1.xpose.msra.mxu0 0.0
        %910 = vmatprep.subr.mxu0 0.0
        %911 = vmatpush1.xpose.msra.mxu0 0.0
        %912 = vmatprep.subr.mxu0 0.0
        %913 = vmatpush1.xpose.msra.mxu0 0.0
        %914 = vmatprep.subr.mxu0 0.0
        %915 = vmatpush1.xpose.msra.mxu0 0.0
        %916 = vmatprep.subr.mxu0 0.0
        %917 = vmatpush1.xpose.msra.mxu0 0.0
        %918 = vmatprep.subr.mxu0 0.0
        %919 = vmatpush1.xpose.msra.mxu0 0.0
        %920 = vmatprep.subr.mxu0 0.0
        %921 = vmatpush1.xpose.msra.mxu0 0.0
        %922 = vmatprep.subr.mxu0 0.0
        %923 = vmatpush1.xpose.msra.mxu0 0.0
        %924 = vmatprep.subr.mxu0 0.0
        %925 = vmatpush1.xpose.msra.mxu0 0.0
        %926 = vmatprep.subr.mxu0 0.0
        %927 = vmatpush1.xpose.msra.mxu0 0.0
        %928 = vmatprep.mubr.f32.mxu0 0.0
        %929 = vmatmul.mubr.f32.gmra.mrb[0].mxu0 %v856
        %v930 = vpop.f32.mrb[0].mxu0
        %v931 = vadd.f32 %v853, %v930
        %v932 = vpop.f32.mrb[0].mxu0
        %933 = vdwg.mxu0
        %vm934 = vcmask 130048
        %v935 = vsel %vm934, %v931, -inf
        %v936 = vrot.slane %v935, 4
        %v937 = vmax.f32 %v935, %v936
        %v938 = vrot.slane %v937, 2
        %v939 = vmax.f32 %v937, %v938
        %v940 = vrot.slane %v939, 1
        %v941 = vmax.f32 %v939, %v940
        %v942 = vsub.f32 %v931, %v941
        %v943 = vmul.f32 %v942, 1.442695
        %v944 = vpow.pop %v943
        %v945 = vsel %vm934, %v944, 0.0
        %v946 = vrot.slane %v945, 4
        %v947 = vadd.f32 %v945, %v946
        %v948 = vrot.slane %v947, 2
        %v949 = vadd.f32 %v947, %v948
        %v950 = vrot.slane %v949, 1
        %v951 = vadd.f32 %v949, %v950
        %v952 = vrcp.pop %v951
        %v953 = vmul.f32 %v944, %v952
        %v955 = vsel %vm934, %v953, 0
        %957 = vmatprep.subr.mxu0 0.0
        %958 = vmatpush1.msra.mxu0 %v836
        %959 = vmatprep.subr.mxu0 0.0
        %960 = vmatpush1.msra.mxu0 %v837
        %961 = vmatprep.subr.mxu0 0.0
        %962 = vmatpush1.msra.mxu0 0.0
        %963 = vmatprep.subr.mxu0 0.0
        %964 = vmatpush1.msra.mxu0 0.0
        %965 = vmatprep.subr.mxu0 0.0
        %966 = vmatpush1.msra.mxu0 0.0
        %967 = vmatprep.subr.mxu0 0.0
        %968 = vmatpush1.msra.mxu0 0.0
        %969 = vmatprep.subr.mxu0 0.0
        %970 = vmatpush1.msra.mxu0 0.0
        %971 = vmatprep.subr.mxu0 0.0
        %972 = vmatpush1.msra.mxu0 0.0
        %973 = vmatprep.subr.mxu0 0.0
        %974 = vmatpush1.msra.mxu0 0.0
        %975 = vmatprep.subr.mxu0 0.0
        %976 = vmatpush1.msra.mxu0 0.0
        %977 = vmatprep.subr.mxu0 0.0
        %978 = vmatpush1.msra.mxu0 0.0
        %979 = vmatprep.subr.mxu0 0.0
        %980 = vmatpush1.msra.mxu0 0.0
        %981 = vmatprep.subr.mxu0 0.0
        %982 = vmatpush1.msra.mxu0 0.0
        %983 = vmatprep.subr.mxu0 0.0
        %984 = vmatpush1.msra.mxu0 0.0
        %985 = vmatprep.subr.mxu0 0.0
        %986 = vmatpush1.msra.mxu0 0.0
        %987 = vmatprep.subr.mxu0 0.0
        %988 = vmatpush1.msra.mxu0 0.0
        %989 = vmatprep.subr.mxu0 0.0
        %990 = vmatpush1.msra.mxu0 0.0
        %991 = vmatprep.subr.mxu0 0.0
        %992 = vmatpush1.msra.mxu0 0.0
        %993 = vmatprep.subr.mxu0 0.0
        %994 = vmatpush1.msra.mxu0 0.0
        %995 = vmatprep.subr.mxu0 0.0
        %996 = vmatpush1.msra.mxu0 0.0
        %997 = vmatprep.subr.mxu0 0.0
        %998 = vmatpush1.msra.mxu0 0.0
        %999 = vmatprep.subr.mxu0 0.0
        %1000 = vmatpush1.msra.mxu0 0.0
        %1001 = vmatprep.subr.mxu0 0.0
        %1002 = vmatpush1.msra.mxu0 0.0
        %1003 = vmatprep.subr.mxu0 0.0
        %1004 = vmatpush1.msra.mxu0 0.0
        %1005 = vmatprep.subr.mxu0 0.0
        %1006 = vmatpush1.msra.mxu0 0.0
        %1007 = vmatprep.subr.mxu0 0.0
        %1008 = vmatpush1.msra.mxu0 0.0
        %1009 = vmatprep.subr.mxu0 0.0
        %1010 = vmatpush1.msra.mxu0 0.0
        %1011 = vmatprep.subr.mxu0 0.0
        %1012 = vmatpush1.msra.mxu0 0.0
        %1013 = vmatprep.subr.mxu0 0.0
        %1014 = vmatpush1.msra.mxu0 0.0
        %1015 = vmatprep.subr.mxu0 0.0
        %1016 = vmatpush1.msra.mxu0 0.0
        %1017 = vmatprep.subr.mxu0 0.0
        %1018 = vmatpush1.msra.mxu0 0.0
        %1019 = vmatprep.subr.mxu0 0.0
        %1020 = vmatpush1.msra.mxu0 0.0
        %1021 = vmatprep.mubr.f32.mxu0 0.0
        %1022 = vmatmul.mubr.f32.gmra.mrb[0].mxu0 %v955
        %v1023 = vpop.f32.mrb[0].mxu0
        %v1024 = vadd.f32 0.0, %v1023
        %v1025 = vpop.f32.mrb[0].mxu0
        %1026 = vdwg.mxu0
        %1027 = vst.msk [vmem:[#allocation5] sm:$0xff] %vm854, %v1024
        %1028 = vrot.lane.b32.xlu0 %v833, 120
        %v1029 = vpop.permute.xlu0 %1028
        %1030 = vrot.lane.b32.xlu0 %v834, 120
        %v1031 = vpop.permute.xlu0 %1030
        %1032 = vrot.lane.b32.xlu0 %v835, 120
        %v1033 = vpop.permute.xlu0 %1032
        %v1034 = vsel %vm854, %v1029, 0
        %v1036 = vsel %vm854, %v1031, 0
        %v1038 = vsel %vm854, %v1033, 0
        %1040 = vmatprep.subr.mxu0 0.0
        %1041 = vmatpush1.xpose.msra.mxu0 %v1036
        %1042 = vmatprep.subr.mxu0 0.0
        %1043 = vmatpush1.xpose.msra.mxu0 %v1038
        %1044 = vmatprep.subr.mxu0 0.0
        %1045 = vmatpush1.xpose.msra.mxu0 0.0
        %1046 = vmatprep.subr.mxu0 0.0
        %1047 = vmatpush1.xpose.msra.mxu0 0.0
        %1048 = vmatprep.subr.mxu0 0.0
        %1049 = vmatpush1.xpose.msra.mxu0 0.0
        %1050 = vmatprep.subr.mxu0 0.0
        %1051 = vmatpush1.xpose.msra.mxu0 0.0
        %1052 = vmatprep.subr.mxu0 0.0
        %1053 = vmatpush1.xpose.msra.mxu0 0.0
        %1054 = vmatprep.subr.mxu0 0.0
        %1055 = vmatpush1.xpose.msra.mxu0 0.0
        %1056 = vmatprep.subr.mxu0 0.0
        %1057 = vmatpush1.xpose.msra.mxu0 0.0
        %1058 = vmatprep.subr.mxu0 0.0
        %1059 = vmatpush1.xpose.msra.mxu0 0.0
        %1060 = vmatprep.subr.mxu0 0.0
        %1061 = vmatpush1.xpose.msra.mxu0 0.0
        %1062 = vmatprep.subr.mxu0 0.0
        %1063 = vmatpush1.xpose.msra.mxu0 0.0
        %1064 = vmatprep.subr.mxu0 0.0
        %1065 = vmatpush1.xpose.msra.mxu0 0.0
        %1066 = vmatprep.subr.mxu0 0.0
        %1067 = vmatpush1.xpose.msra.mxu0 0.0
        %1068 = vmatprep.subr.mxu0 0.0
        %1069 = vmatpush1.xpose.msra.mxu0 0.0
        %1070 = vmatprep.subr.mxu0 0.0
        %1071 = vmatpush1.xpose.msra.mxu0 0.0
        %1072 = vmatprep.subr.mxu0 0.0
        %1073 = vmatpush1.xpose.msra.mxu0 0.0
        %1074 = vmatprep.subr.mxu0 0.0
        %1075 = vmatpush1.xpose.msra.mxu0 0.0
        %1076 = vmatprep.subr.mxu0 0.0
        %1077 = vmatpush1.xpose.msra.mxu0 0.0
        %1078 = vmatprep.subr.mxu0 0.0
        %1079 = vmatpush1.xpose.msra.mxu0 0.0
        %1080 = vmatprep.subr.mxu0 0.0
        %1081 = vmatpush1.xpose.msra.mxu0 0.0
        %1082 = vmatprep.subr.mxu0 0.0
        %1083 = vmatpush1.xpose.msra.mxu0 0.0
        %1084 = vmatprep.subr.mxu0 0.0
        %1085 = vmatpush1.xpose.msra.mxu0 0.0
        %1086 = vmatprep.subr.mxu0 0.0
        %1087 = vmatpush1.xpose.msra.mxu0 0.0
        %1088 = vmatprep.subr.mxu0 0.0
        %1089 = vmatpush1.xpose.msra.mxu0 0.0
        %1090 = vmatprep.subr.mxu0 0.0
        %1091 = vmatpush1.xpose.msra.mxu0 0.0
        %1092 = vmatprep.subr.mxu0 0.0
        %1093 = vmatpush1.xpose.msra.mxu0 0.0
        %1094 = vmatprep.subr.mxu0 0.0
        %1095 = vmatpush1.xpose.msra.mxu0 0.0
        %1096 = vmatprep.subr.mxu0 0.0
        %1097 = vmatpush1.xpose.msra.mxu0 0.0
        %1098 = vmatprep.subr.mxu0 0.0
        %1099 = vmatpush1.xpose.msra.mxu0 0.0
        %1100 = vmatprep.subr.mxu0 0.0
        %1101 = vmatpush1.xpose.msra.mxu0 0.0
        %1102 = vmatprep.subr.mxu0 0.0
        %1103 = vmatpush1.xpose.msra.mxu0 0.0
        %1104 = vmatprep.mubr.f32.mxu0 0.0
        %1105 = vmatmul.mubr.f32.gmra.mrb[0].mxu0 %v1034
        %v1106 = vpop.f32.mrb[0].mxu0
        %v1107 = vadd.f32 %v853, %v1106
        %v1108 = vpop.f32.mrb[0].mxu0
        %1109 = vdwg.mxu0
        %v1110 = vsel %vm934, %v1107, -inf
        %v1111 = vrot.slane %v1110, 4
        %v1112 = vmax.f32 %v1110, %v1111
        %v1113 = vrot.slane %v1112, 2
        %v1114 = vmax.f32 %v1112, %v1113
        %v1115 = vrot.slane %v1114, 1
        %v1116 = vmax.f32 %v1114, %v1115
        %v1117 = vsub.f32 %v1107, %v1116
        %v1118 = vmul.f32 %v1117, 1.442695
        %v1119 = vpow.pop %v1118
        %v1120 = vsel %vm934, %v1119, 0.0
        %v1121 = vrot.slane %v1120, 4
        %v1122 = vadd.f32 %v1120, %v1121
        %v1123 = vrot.slane %v1122, 2
        %v1124 = vadd.f32 %v1122, %v1123
        %v1125 = vrot.slane %v1124, 1
        %v1126 = vadd.f32 %v1124, %v1125
        %v1127 = vrcp.pop %v1126
        %v1128 = vmul.f32 %v1119, %v1127
        %1131 = vrot.lane.b32.xlu0 %v836, 120
        %v1132 = vpop.permute.xlu0 %1131
        %1133 = vrot.lane.b32.xlu0 %v837, 120
        %v1134 = vpop.permute.xlu0 %1133
        %v1138 = vsel %vm934, %v1128, 0
        %1140 = vmatprep.subr.mxu0 0.0
        %1141 = vmatpush1.msra.mxu0 %v1132
        %1142 = vmatprep.subr.mxu0 0.0
        %1143 = vmatpush1.msra.mxu0 %v1134
        %1144 = vmatprep.subr.mxu0 0.0
        %1145 = vmatpush1.msra.mxu0 0.0
        %1146 = vmatprep.subr.mxu0 0.0
        %1147 = vmatpush1.msra.mxu0 0.0
        %1148 = vmatprep.subr.mxu0 0.0
        %1149 = vmatpush1.msra.mxu0 0.0
        %1150 = vmatprep.subr.mxu0 0.0
        %1151 = vmatpush1.msra.mxu0 0.0
        %1152 = vmatprep.subr.mxu0 0.0
        %1153 = vmatpush1.msra.mxu0 0.0
        %1154 = vmatprep.subr.mxu0 0.0
        %1155 = vmatpush1.msra.mxu0 0.0
        %1156 = vmatprep.subr.mxu0 0.0
        %1157 = vmatpush1.msra.mxu0 0.0
        %1158 = vmatprep.subr.mxu0 0.0
        %1159 = vmatpush1.msra.mxu0 0.0
        %1160 = vmatprep.subr.mxu0 0.0
        %1161 = vmatpush1.msra.mxu0 0.0
        %1162 = vmatprep.subr.mxu0 0.0
        %1163 = vmatpush1.msra.mxu0 0.0
        %1164 = vmatprep.subr.mxu0 0.0
        %1165 = vmatpush1.msra.mxu0 0.0
        %1166 = vmatprep.subr.mxu0 0.0
        %1167 = vmatpush1.msra.mxu0 0.0
        %1168 = vmatprep.subr.mxu0 0.0
        %1169 = vmatpush1.msra.mxu0 0.0
        %1170 = vmatprep.subr.mxu0 0.0
        %1171 = vmatpush1.msra.mxu0 0.0
        %1172 = vmatprep.subr.mxu0 0.0
        %1173 = vmatpush1.msra.mxu0 0.0
        %1174 = vmatprep.subr.mxu0 0.0
        %1175 = vmatpush1.msra.mxu0 0.0
        %1176 = vmatprep.subr.mxu0 0.0
        %1177 = vmatpush1.msra.mxu0 0.0
        %1178 = vmatprep.subr.mxu0 0.0
        %1179 = vmatpush1.msra.mxu0 0.0
        %1180 = vmatprep.subr.mxu0 0.0
        %1181 = vmatpush1.msra.mxu0 0.0
        %1182 = vmatprep.subr.mxu0 0.0
        %1183 = vmatpush1.msra.mxu0 0.0
        %1184 = vmatprep.subr.mxu0 0.0
        %1185 = vmatpush1.msra.mxu0 0.0
        %1186 = vmatprep.subr.mxu0 0.0
        %1187 = vmatpush1.msra.mxu0 0.0
        %1188 = vmatprep.subr.mxu0 0.0
        %1189 = vmatpush1.msra.mxu0 0.0
        %1190 = vmatprep.subr.mxu0 0.0
        %1191 = vmatpush1.msra.mxu0 0.0
        %1192 = vmatprep.subr.mxu0 0.0
        %1193 = vmatpush1.msra.mxu0 0.0
        %1194 = vmatprep.subr.mxu0 0.0
        %1195 = vmatpush1.msra.mxu0 0.0
        %1196 = vmatprep.subr.mxu0 0.0
        %1197 = vmatpush1.msra.mxu0 0.0
        %1198 = vmatprep.subr.mxu0 0.0
        %1199 = vmatpush1.msra.mxu0 0.0
        %1200 = vmatprep.subr.mxu0 0.0
        %1201 = vmatpush1.msra.mxu0 0.0
        %1202 = vmatprep.subr.mxu0 0.0
        %1203 = vmatpush1.msra.mxu0 0.0
        %1204 = vmatprep.mubr.f32.mxu0 0.0
        %1205 = vmatmul.mubr.f32.gmra.mrb[0].mxu0 %v1138
        %v1206 = vpop.f32.mrb[0].mxu0
        %v1207 = vadd.f32 0.0, %v1206
        %v1208 = vpop.f32.mrb[0].mxu0
        %1209 = vdwg.mxu0
        %1211 = vrot.lane.b32.xlu0 %v1207, 8
        %v1212 = vpop.permute.xlu0 %1211
        %vm1214 = vcmask 130112
        %1215 = vst.msk [vmem:[#allocation5] sm:$0xff] %vm1214, %v1212
        %1216 = vrot.lane.b32.xlu0 %v833, 112
        %v1217 = vpop.permute.xlu0 %1216
        %1218 = vrot.lane.b32.xlu0 %v834, 112
        %v1219 = vpop.permute.xlu0 %1218
        %1220 = vrot.lane.b32.xlu0 %v835, 112
        %v1221 = vpop.permute.xlu0 %1220
        %v1222 = vsel %vm854, %v1217, 0
        %v1224 = vsel %vm854, %v1219, 0
        %v1226 = vsel %vm854, %v1221, 0
        %1228 = vmatprep.subr.mxu0 0.0
        %1229 = vmatpush1.xpose.msra.mxu0 %v1224
        %1230 = vmatprep.subr.mxu0 0.0
        %1231 = vmatpush1.xpose.msra.mxu0 %v1226
        %1232 = vmatprep.subr.mxu0 0.0
        %1233 = vmatpush1.xpose.msra.mxu0 0.0
        %1234 = vmatprep.subr.mxu0 0.0
        %1235 = vmatpush1.xpose.msra.mxu0 0.0
        %1236 = vmatprep.subr.mxu0 0.0
        %1237 = vmatpush1.xpose.msra.mxu0 0.0
        %1238 = vmatprep.subr.mxu0 0.0
        %1239 = vmatpush1.xpose.msra.mxu0 0.0
        %1240 = vmatprep.subr.mxu0 0.0
        %1241 = vmatpush1.xpose.msra.mxu0 0.0
        %1242 = vmatprep.subr.mxu0 0.0
        %1243 = vmatpush1.xpose.msra.mxu0 0.0
        %1244 = vmatprep.subr.mxu0 0.0
        %1245 = vmatpush1.xpose.msra.mxu0 0.0
        %1246 = vmatprep.subr.mxu0 0.0
        %1247 = vmatpush1.xpose.msra.mxu0 0.0
        %1248 = vmatprep.subr.mxu0 0.0
        %1249 = vmatpush1.xpose.msra.mxu0 0.0
        %1250 = vmatprep.subr.mxu0 0.0
        %1251 = vmatpush1.xpose.msra.mxu0 0.0
        %1252 = vmatprep.subr.mxu0 0.0
        %1253 = vmatpush1.xpose.msra.mxu0 0.0
        %1254 = vmatprep.subr.mxu0 0.0
        %1255 = vmatpush1.xpose.msra.mxu0 0.0
        %1256 = vmatprep.subr.mxu0 0.0
        %1257 = vmatpush1.xpose.msra.mxu0 0.0
        %1258 = vmatprep.subr.mxu0 0.0
        %1259 = vmatpush1.xpose.msra.mxu0 0.0
        %1260 = vmatprep.subr.mxu0 0.0
        %1261 = vmatpush1.xpose.msra.mxu0 0.0
        %1262 = vmatprep.subr.mxu0 0.0
        %1263 = vmatpush1.xpose.msra.mxu0 0.0
        %1264 = vmatprep.subr.mxu0 0.0
        %1265 = vmatpush1.xpose.msra.mxu0 0.0
        %1266 = vmatprep.subr.mxu0 0.0
        %1267 = vmatpush1.xpose.msra.mxu0 0.0
        %1268 = vmatprep.subr.mxu0 0.0
        %1269 = vmatpush1.xpose.msra.mxu0 0.0
        %1270 = vmatprep.subr.mxu0 0.0
        %1271 = vmatpush1.xpose.msra.mxu0 0.0
        %1272 = vmatprep.subr.mxu0 0.0
        %1273 = vmatpush1.xpose.msra.mxu0 0.0
        %1274 = vmatprep.subr.mxu0 0.0
        %1275 = vmatpush1.xpose.msra.mxu0 0.0
        %1276 = vmatprep.subr.mxu0 0.0
        %1277 = vmatpush1.xpose.msra.mxu0 0.0
        %1278 = vmatprep.subr.mxu0 0.0
        %1279 = vmatpush1.xpose.msra.mxu0 0.0
        %1280 = vmatprep.subr.mxu0 0.0
        %1281 = vmatpush1.xpose.msra.mxu0 0.0
        %1282 = vmatprep.subr.mxu0 0.0
        %1283 = vmatpush1.xpose.msra.mxu0 0.0
        %1284 = vmatprep.subr.mxu0 0.0
        %1285 = vmatpush1.xpose.msra.mxu0 0.0
        %1286 = vmatprep.subr.mxu0 0.0
        %1287 = vmatpush1.xpose.msra.mxu0 0.0
        %1288 = vmatprep.subr.mxu0 0.0
        %1289 = vmatpush1.xpose.msra.mxu0 0.0
        %1290 = vmatprep.subr.mxu0 0.0
        %1291 = vmatpush1.xpose.msra.mxu0 0.0
        %1292 = vmatprep.mubr.f32.mxu0 0.0
        %1293 = vmatmul.mubr.f32.gmra.mrb[0].mxu0 %v1222
        %v1294 = vpop.f32.mrb[0].mxu0
        %v1295 = vadd.f32 %v853, %v1294
        %v1296 = vpop.f32.mrb[0].mxu0
        %1297 = vdwg.mxu0
        %v1298 = vsel %vm934, %v1295, -inf
        %v1299 = vrot.slane %v1298, 4
        %v1300 = vmax.f32 %v1298, %v1299
        %v1301 = vrot.slane %v1300, 2
        %v1302 = vmax.f32 %v1300, %v1301
        %v1303 = vrot.slane %v1302, 1
        %v1304 = vmax.f32 %v1302, %v1303
        %v1305 = vsub.f32 %v1295, %v1304
        %v1306 = vmul.f32 %v1305, 1.442695
        %v1307 = vpow.pop %v1306
        %v1308 = vsel %vm934, %v1307, 0.0
        %v1309 = vrot.slane %v1308, 4
        %v1310 = vadd.f32 %v1308, %v1309
        %v1311 = vrot.slane %v1310, 2
        %v1312 = vadd.f32 %v1310, %v1311
        %v1313 = vrot.slane %v1312, 1
        %v1314 = vadd.f32 %v1312, %v1313
        %v1315 = vrcp.pop %v1314
        %v1316 = vmul.f32 %v1307, %v1315
        %1317 = vrot.lane.b32.xlu0 %v836, 112
        %v1318 = vpop.permute.xlu0 %1317
        %1319 = vrot.lane.b32.xlu0 %v837, 112
        %v1320 = vpop.permute.xlu0 %1319
        %v1324 = vsel %vm934, %v1316, 0
        %1326 = vmatprep.subr.mxu0 0.0
        %1327 = vmatpush1.msra.mxu0 %v1318
        %1328 = vmatprep.subr.mxu0 0.0
        %1329 = vmatpush1.msra.mxu0 %v1320
        %1330 = vmatprep.subr.mxu0 0.0
        %1331 = vmatpush1.msra.mxu0 0.0
        %1332 = vmatprep.subr.mxu0 0.0
        %1333 = vmatpush1.msra.mxu0 0.0
        %1334 = vmatprep.subr.mxu0 0.0
        %1335 = vmatpush1.msra.mxu0 0.0
        %1336 = vmatprep.subr.mxu0 0.0
        %1337 = vmatpush1.msra.mxu0 0.0
        %1338 = vmatprep.subr.mxu0 0.0
        %1339 = vmatpush1.msra.mxu0 0.0
        %1340 = vmatprep.subr.mxu0 0.0
        %1341 = vmatpush1.msra.mxu0 0.0
        %1342 = vmatprep.subr.mxu0 0.0
        %1343 = vmatpush1.msra.mxu0 0.0
        %1344 = vmatprep.subr.mxu0 0.0
        %1345 = vmatpush1.msra.mxu0 0.0
        %1346 = vmatprep.subr.mxu0 0.0
        %1347 = vmatpush1.msra.mxu0 0.0
        %1348 = vmatprep.subr.mxu0 0.0
        %1349 = vmatpush1.msra.mxu0 0.0
        %1350 = vmatprep.subr.mxu0 0.0
        %1351 = vmatpush1.msra.mxu0 0.0
        %1352 = vmatprep.subr.mxu0 0.0
        %1353 = vmatpush1.msra.mxu0 0.0
        %1354 = vmatprep.subr.mxu0 0.0
        %1355 = vmatpush1.msra.mxu0 0.0
        %1356 = vmatprep.subr.mxu0 0.0
        %1357 = vmatpush1.msra.mxu0 0.0
        %1358 = vmatprep.subr.mxu0 0.0
        %1359 = vmatpush1.msra.mxu0 0.0
        %1360 = vmatprep.subr.mxu0 0.0
        %1361 = vmatpush1.msra.mxu0 0.0
        %1362 = vmatprep.subr.mxu0 0.0
        %1363 = vmatpush1.msra.mxu0 0.0
        %1364 = vmatprep.subr.mxu0 0.0
        %1365 = vmatpush1.msra.mxu0 0.0
        %1366 = vmatprep.subr.mxu0 0.0
        %1367 = vmatpush1.msra.mxu0 0.0
        %1368 = vmatprep.subr.mxu0 0.0
        %1369 = vmatpush1.msra.mxu0 0.0
        %1370 = vmatprep.subr.mxu0 0.0
        %1371 = vmatpush1.msra.mxu0 0.0
        %1372 = vmatprep.subr.mxu0 0.0
        %1373 = vmatpush1.msra.mxu0 0.0
        %1374 = vmatprep.subr.mxu0 0.0
        %1375 = vmatpush1.msra.mxu0 0.0
        %1376 = vmatprep.subr.mxu0 0.0
        %1377 = vmatpush1.msra.mxu0 0.0
        %1378 = vmatprep.subr.mxu0 0.0
        %1379 = vmatpush1.msra.mxu0 0.0
        %1380 = vmatprep.subr.mxu0 0.0
        %1381 = vmatpush1.msra.mxu0 0.0
        %1382 = vmatprep.subr.mxu0 0.0
        %1383 = vmatpush1.msra.mxu0 0.0
        %1384 = vmatprep.subr.mxu0 0.0
        %1385 = vmatpush1.msra.mxu0 0.0
        %1386 = vmatprep.subr.mxu0 0.0
        %1387 = vmatpush1.msra.mxu0 0.0
        %1388 = vmatprep.subr.mxu0 0.0
        %1389 = vmatpush1.msra.mxu0 0.0
        %1390 = vmatprep.mubr.f32.mxu0 0.0
        %1391 = vmatmul.mubr.f32.gmra.mrb[0].mxu0 %v1324
        %v1392 = vpop.f32.mrb[0].mxu0
        %v1393 = vadd.f32 0.0, %v1392
        %v1394 = vpop.f32.mrb[0].mxu0
        %1395 = vdwg.mxu0
        %1397 = vrot.lane.b32.xlu0 %v1393, 16
        %v1398 = vpop.permute.xlu0 %1397
        %vm1400 = vcmask 195712
        %1401 = vst.msk [vmem:[#allocation5] sm:$0xff] %vm1400, %v1398
        %1402 = vrot.lane.b32.xlu0 %v833, 104
        %v1403 = vpop.permute.xlu0 %1402
        %1404 = vrot.lane.b32.xlu0 %v834, 104
        %v1405 = vpop.permute.xlu0 %1404
        %1406 = vrot.lane.b32.xlu0 %v835, 104
        %v1407 = vpop.permute.xlu0 %1406
        %v1408 = vsel %vm854, %v1403, 0
        %v1410 = vsel %vm854, %v1405, 0
        %v1412 = vsel %vm854, %v1407, 0
        %1414 = vmatprep.subr.mxu0 0.0
        %1415 = vmatpush1.xpose.msra.mxu0 %v1410
        %1416 = vmatprep.subr.mxu0 0.0
        %1417 = vmatpush1.xpose.msra.mxu0 %v1412
        %1418 = vmatprep.subr.mxu0 0.0
        %1419 = vmatpush1.xpose.msra.mxu0 0.0
        %1420 = vmatprep.subr.mxu0 0.0
        %1421 = vmatpush1.xpose.msra.mxu0 0.0
        %1422 = vmatprep.subr.mxu0 0.0
        %1423 = vmatpush1.xpose.msra.mxu0 0.0
        %1424 = vmatprep.subr.mxu0 0.0
        %1425 = vmatpush1.xpose.msra.mxu0 0.0
        %1426 = vmatprep.subr.mxu0 0.0
        %1427 = vmatpush1.xpose.msra.mxu0 0.0
        %1428 = vmatprep.subr.mxu0 0.0
        %1429 = vmatpush1.xpose.msra.mxu0 0.0
        %1430 = vmatprep.subr.mxu0 0.0
        %1431 = vmatpush1.xpose.msra.mxu0 0.0
        %1432 = vmatprep.subr.mxu0 0.0
        %1433 = vmatpush1.xpose.msra.mxu0 0.0
        %1434 = vmatprep.subr.mxu0 0.0
        %1435 = vmatpush1.xpose.msra.mxu0 0.0
        %1436 = vmatprep.subr.mxu0 0.0
        %1437 = vmatpush1.xpose.msra.mxu0 0.0
        %1438 = vmatprep.subr.mxu0 0.0
        %1439 = vmatpush1.xpose.msra.mxu0 0.0
        %1440 = vmatprep.subr.mxu0 0.0
        %1441 = vmatpush1.xpose.msra.mxu0 0.0
        %1442 = vmatprep.subr.mxu0 0.0
        %1443 = vmatpush1.xpose.msra.mxu0 0.0
        %1444 = vmatprep.subr.mxu0 0.0
        %1445 = vmatpush1.xpose.msra.mxu0 0.0
        %1446 = vmatprep.subr.mxu0 0.0
        %1447 = vmatpush1.xpose.msra.mxu0 0.0
        %1448 = vmatprep.subr.mxu0 0.0
        %1449 = vmatpush1.xpose.msra.mxu0 0.0
        %1450 = vmatprep.subr.mxu0 0.0
        %1451 = vmatpush1.xpose.msra.mxu0 0.0
        %1452 = vmatprep.subr.mxu0 0.0
        %1453 = vmatpush1.xpose.msra.mxu0 0.0
        %1454 = vmatprep.subr.mxu0 0.0
        %1455 = vmatpush1.xpose.msra.mxu0 0.0
        %1456 = vmatprep.subr.mxu0 0.0
        %1457 = vmatpush1.xpose.msra.mxu0 0.0
        %1458 = vmatprep.subr.mxu0 0.0
        %1459 = vmatpush1.xpose.msra.mxu0 0.0
        %1460 = vmatprep.subr.mxu0 0.0
        %1461 = vmatpush1.xpose.msra.mxu0 0.0
        %1462 = vmatprep.subr.mxu0 0.0
        %1463 = vmatpush1.xpose.msra.mxu0 0.0
        %1464 = vmatprep.subr.mxu0 0.0
        %1465 = vmatpush1.xpose.msra.mxu0 0.0
        %1466 = vmatprep.subr.mxu0 0.0
        %1467 = vmatpush1.xpose.msra.mxu0 0.0
        %1468 = vmatprep.subr.mxu0 0.0
        %1469 = vmatpush1.xpose.msra.mxu0 0.0
        %1470 = vmatprep.subr.mxu0 0.0
        %1471 = vmatpush1.xpose.msra.mxu0 0.0
        %1472 = vmatprep.subr.mxu0 0.0
        %1473 = vmatpush1.xpose.msra.mxu0 0.0
        %1474 = vmatprep.subr.mxu0 0.0
        %1475 = vmatpush1.xpose.msra.mxu0 0.0
        %1476 = vmatprep.subr.mxu0 0.0
        %1477 = vmatpush1.xpose.msra.mxu0 0.0
        %1478 = vmatprep.mubr.f32.mxu0 0.0
        %1479 = vmatmul.mubr.f32.gmra.mrb[0].mxu0 %v1408
        %v1480 = vpop.f32.mrb[0].mxu0
        %v1481 = vadd.f32 %v853, %v1480
        %v1482 = vpop.f32.mrb[0].mxu0
        %1483 = vdwg.mxu0
        %v1484 = vsel %vm934, %v1481, -inf
        %v1485 = vrot.slane %v1484, 4
        %v1486 = vmax.f32 %v1484, %v1485
        %v1487 = vrot.slane %v1486, 2
        %v1488 = vmax.f32 %v1486, %v1487
        %v1489 = vrot.slane %v1488, 1
        %v1490 = vmax.f32 %v1488, %v1489
        %v1491 = vsub.f32 %v1481, %v1490
        %v1492 = vmul.f32 %v1491, 1.442695
        %v1493 = vpow.pop %v1492
        %v1494 = vsel %vm934, %v1493, 0.0
        %v1495 = vrot.slane %v1494, 4
        %v1496 = vadd.f32 %v1494, %v1495
        %v1497 = vrot.slane %v1496, 2
        %v1498 = vadd.f32 %v1496, %v1497
        %v1499 = vrot.slane %v1498, 1
        %v1500 = vadd.f32 %v1498, %v1499
        %v1501 = vrcp.pop %v1500
        %v1502 = vmul.f32 %v1493, %v1501
        %1503 = vrot.lane.b32.xlu0 %v836, 104
        %v1504 = vpop.permute.xlu0 %1503
        %1505 = vrot.lane.b32.xlu0 %v837, 104
        %v1506 = vpop.permute.xlu0 %1505
        %v1510 = vsel %vm934, %v1502, 0
        %1512 = vmatprep.subr.mxu0 0.0
        %1513 = vmatpush1.msra.mxu0 %v1504
        %1514 = vmatprep.subr.mxu0 0.0
        %1515 = vmatpush1.msra.mxu0 %v1506
        %1516 = vmatprep.subr.mxu0 0.0
        %1517 = vmatpush1.msra.mxu0 0.0
        %1518 = vmatprep.subr.mxu0 0.0
        %1519 = vmatpush1.msra.mxu0 0.0
        %1520 = vmatprep.subr.mxu0 0.0
        %1521 = vmatpush1.msra.mxu0 0.0
        %1522 = vmatprep.subr.mxu0 0.0
        %1523 = vmatpush1.msra.mxu0 0.0
        %1524 = vmatprep.subr.mxu0 0.0
        %1525 = vmatpush1.msra.mxu0 0.0
        %1526 = vmatprep.subr.mxu0 0.0
        %1527 = vmatpush1.msra.mxu0 0.0
        %1528 = vmatprep.subr.mxu0 0.0
        %1529 = vmatpush1.msra.mxu0 0.0
        %1530 = vmatprep.subr.mxu0 0.0
        %1531 = vmatpush1.msra.mxu0 0.0
        %1532 = vmatprep.subr.mxu0 0.0
        %1533 = vmatpush1.msra.mxu0 0.0
        %1534 = vmatprep.subr.mxu0 0.0
        %1535 = vmatpush1.msra.mxu0 0.0
        %1536 = vmatprep.subr.mxu0 0.0
        %1537 = vmatpush1.msra.mxu0 0.0
        %1538 = vmatprep.subr.mxu0 0.0
        %1539 = vmatpush1.msra.mxu0 0.0
        %1540 = vmatprep.subr.mxu0 0.0
        %1541 = vmatpush1.msra.mxu0 0.0
        %1542 = vmatprep.subr.mxu0 0.0
        %1543 = vmatpush1.msra.mxu0 0.0
        %1544 = vmatprep.subr.mxu0 0.0
        %1545 = vmatpush1.msra.mxu0 0.0
        %1546 = vmatprep.subr.mxu0 0.0
        %1547 = vmatpush1.msra.mxu0 0.0
        %1548 = vmatprep.subr.mxu0 0.0
        %1549 = vmatpush1.msra.mxu0 0.0
        %1550 = vmatprep.subr.mxu0 0.0
        %1551 = vmatpush1.msra.mxu0 0.0
        %1552 = vmatprep.subr.mxu0 0.0
        %1553 = vmatpush1.msra.mxu0 0.0
        %1554 = vmatprep.subr.mxu0 0.0
        %1555 = vmatpush1.msra.mxu0 0.0
        %1556 = vmatprep.subr.mxu0 0.0
        %1557 = vmatpush1.msra.mxu0 0.0
        %1558 = vmatprep.subr.mxu0 0.0
        %1559 = vmatpush1.msra.mxu0 0.0
        %1560 = vmatprep.subr.mxu0 0.0
        %1561 = vmatpush1.msra.mxu0 0.0
        %1562 = vmatprep.subr.mxu0 0.0
        %1563 = vmatpush1.msra.mxu0 0.0
        %1564 = vmatprep.subr.mxu0 0.0
        %1565 = vmatpush1.msra.mxu0 0.0
        %1566 = vmatprep.subr.mxu0 0.0
        %1567 = vmatpush1.msra.mxu0 0.0
        %1568 = vmatprep.subr.mxu0 0.0
        %1569 = vmatpush1.msra.mxu0 0.0
        %1570 = vmatprep.subr.mxu0 0.0
        %1571 = vmatpush1.msra.mxu0 0.0
        %1572 = vmatprep.subr.mxu0 0.0
        %1573 = vmatpush1.msra.mxu0 0.0
        %1574 = vmatprep.subr.mxu0 0.0
        %1575 = vmatpush1.msra.mxu0 0.0
        %1576 = vmatprep.mubr.f32.mxu0 0.0
        %1577 = vmatmul.mubr.f32.gmra.mrb[0].mxu0 %v1510
        %v1578 = vpop.f32.mrb[0].mxu0
        %v1579 = vadd.f32 0.0, %v1578
        %v1580 = vpop.f32.mrb[0].mxu0
        %1581 = vdwg.mxu0
        %1583 = vrot.lane.b32.xlu0 %v1579, 24
        %v1584 = vpop.permute.xlu0 %1583
        %vm1586 = vcmask 261312
        %1587 = vst.msk [vmem:[#allocation5] sm:$0xff] %vm1586, %v1584
        %v1588 = vld [vmem:[#allocation5] sm:$0xff]
        %v1589 = vld [vmem:[#allocation15] sm:$0xff]
        %v1590 = vld [vmem:[#allocation15 + $0x8] sm:$0xff]
        %v1591 = vld [vmem:[#allocation15 + $0x10] sm:$0xff]
        %v1592 = vld [vmem:[#allocation15 + $0x18] sm:$0xff]
        %v1593 = vld [vmem:[%s11] sm:$0x1]
        %v1595 = vlaneseq
        %v1596 = vshrl.u32 %v1595, 7
        %v1597 = vsub.s32 0, %v1596
        %v1598 = vrot.slane %v1593, %v1597
        %v1601 = vsel %vm576, %v1588, 0
        %1603 = vmatprep.subr.mxu0 0.0
        %1604 = vmatpush1.msra.mxu0 %v1589
        %1605 = vmatprep.subr.mxu0 0.0
        %1606 = vmatpush1.msra.mxu0 %v1590
        %1607 = vmatprep.subr.mxu0 0.0
        %1608 = vmatpush1.msra.mxu0 %v1591
        %1609 = vmatprep.subr.mxu0 0.0
        %1610 = vmatpush1.msra.mxu0 %v1592
        %1611 = vmatprep.subr.mxu0 0.0
        %1612 = vmatpush1.msra.mxu0 0.0
        %1613 = vmatprep.subr.mxu0 0.0
        %1614 = vmatpush1.msra.mxu0 0.0
        %1615 = vmatprep.subr.mxu0 0.0
        %1616 = vmatpush1.msra.mxu0 0.0
        %1617 = vmatprep.subr.mxu0 0.0
        %1618 = vmatpush1.msra.mxu0 0.0
        %1619 = vmatprep.subr.mxu0 0.0
        %1620 = vmatpush1.msra.mxu0 0.0
        %1621 = vmatprep.subr.mxu0 0.0
        %1622 = vmatpush1.msra.mxu0 0.0
        %1623 = vmatprep.subr.mxu0 0.0
        %1624 = vmatpush1.msra.mxu0 0.0
        %1625 = vmatprep.subr.mxu0 0.0
        %1626 = vmatpush1.msra.mxu0 0.0
        %1627 = vmatprep.subr.mxu0 0.0
        %1628 = vmatpush1.msra.mxu0 0.0
        %1629 = vmatprep.subr.mxu0 0.0
        %1630 = vmatpush1.msra.mxu0 0.0
        %1631 = vmatprep.subr.mxu0 0.0
        %1632 = vmatpush1.msra.mxu0 0.0
        %1633 = vmatprep.subr.mxu0 0.0
        %1634 = vmatpush1.msra.mxu0 0.0
        %1635 = vmatprep.subr.mxu0 0.0
        %1636 = vmatpush1.msra.mxu0 0.0
        %1637 = vmatprep.subr.mxu0 0.0
        %1638 = vmatpush1.msra.mxu0 0.0
        %1639 = vmatprep.subr.mxu0 0.0
        %1640 = vmatpush1.msra.mxu0 0.0
        %1641 = vmatprep.subr.mxu0 0.0
        %1642 = vmatpush1.msra.mxu0 0.0
        %1643 = vmatprep.subr.mxu0 0.0
        %1644 = vmatpush1.msra.mxu0 0.0
        %1645 = vmatprep.subr.mxu0 0.0
        %1646 = vmatpush1.msra.mxu0 0.0
        %1647 = vmatprep.subr.mxu0 0.0
        %1648 = vmatpush1.msra.mxu0 0.0
        %1649 = vmatprep.subr.mxu0 0.0
        %1650 = vmatpush1.msra.mxu0 0.0
        %1651 = vmatprep.subr.mxu0 0.0
        %1652 = vmatpush1.msra.mxu0 0.0
        %1653 = vmatprep.subr.mxu0 0.0
        %1654 = vmatpush1.msra.mxu0 0.0
        %1655 = vmatprep.subr.mxu0 0.0
        %1656 = vmatpush1.msra.mxu0 0.0
        %1657 = vmatprep.subr.mxu0 0.0
        %1658 = vmatpush1.msra.mxu0 0.0
        %1659 = vmatprep.subr.mxu0 0.0
        %1660 = vmatpush1.msra.mxu0 0.0
        %1661 = vmatprep.subr.mxu0 0.0
        %1662 = vmatpush1.msra.mxu0 0.0
        %1663 = vmatprep.subr.mxu0 0.0
        %1664 = vmatpush1.msra.mxu0 0.0
        %1665 = vmatprep.subr.mxu0 0.0
        %1666 = vmatpush1.msra.mxu0 0.0
        %1667 = vmatprep.mubr.f32.mxu0 0.0
        %1668 = vmatmul.mubr.f32.gmra.mrb[0].mxu0 %v1601
        %v1669 = vpop.f32.mrb[0].mxu0
        %v1670 = vadd.f32 %v1598, %v1669
        %v1671 = vpop.f32.mrb[0].mxu0
        %1672 = vdwg.mxu0
        %1673 = vst.msk [vmem:[%s556] sm:$0xff] %vm576, %v1670
        %s1674 = sand.u32 %s314, 1
        %s1675 = scalar_lea.sflag [#allocation8], %s1674
        %s1676 = sand.u32 %s314, 1
        %s1677 = smul.addr %s1676, 8
        %s1678 = scalar_lea.vmem [#allocation17], %s1677
        // Predicated region
        $region93: #{tpu_custom_call.1} parent=67 // pred_check
          %p1679 = pneg %p324
        $region94: #{tpu_custom_call.1} parent=67 // pred_check_branch
          %1681 = sbr.rel (%p1679) target = $region96
        $region95: #{tpu_custom_call.1} parent=67 // pred_region
          %s1683 = ssub.s32 128, 128
          %1684 = vsyncadd %s1675, %s1683
          %s1685 = smul.addr %s34, 128
          %s1686 = scalar_lea.hbm %s12, %s1685
          %s1688 = sshll.u32 %s1678, 4
          %s1689 = int_to_ptr.vmem [resolvable:$true] %s1688
          %1691 = dma.vmem_to_hbm [thread:$0]  %s1689, 128, %s1686, %s1675
        $region96: #{tpu_custom_call.1} parent=67 // pred_fallthru
          _
      $region68: #{tpu_custom_call.1} parent=5 // pred_fallthru
        _
      %p1692 = scmp.le.s32.totalorder 2, %s29
      // Predicated region
      $region97: #{tpu_custom_call.1} parent=5 // pred_check
        %p1693 = pneg %p1692
      $region98: #{tpu_custom_call.1} parent=5 // pred_check_branch
        %1695 = sbr.rel (%p1693) target = $region100
      $region99: #{tpu_custom_call.1} parent=5 // pred_region
        %s1696 = ssub.s32 %s29, 2
        // Predicated region
        $region101: #{tpu_custom_call.1} parent=99 // pred_check
          %p1697 = pneg %p330
        $region102: #{tpu_custom_call.1} parent=99 // pred_check_branch
          %1699 = sbr.rel (%p1697) target = $region104
        $region103: #{tpu_custom_call.1} parent=99 // pred_region
          %s1700 = sand.u32 %s315, 1
          %s1701 = scalar_lea.sflag [#allocation8], %s1700
          %s1702 = sand.u32 %s315, 1
          %s1703 = smul.addr %s1702, 8
          %s1704 = scalar_lea.vmem [#allocation17], %s1703
          %1705 = dma.done %s1701, 128
        $region104: #{tpu_custom_call.1} parent=99 // pred_fallthru
          _
      $region100: #{tpu_custom_call.1} parent=5 // pred_fallthru
        _
    $region6: #{tpu_custom_call.1} parent=1 // loop_footer
      %s33 = sadd.s32 1, %s29
    $region7: #{tpu_custom_call.1} parent=1 // loop_footer_branch
      %28 = sbr.rel target = $region3
    $region8: #{tpu_custom_call.1} parent=1 // loop_exit
      _
    %1706 = vsyncpa [#allocation7], 1
    %s1707 = scalar_lea.sflag [#allocation7], 1
    %1708 = vsyncpa %s1707, 1
    %1709 = vsyncpa [#allocation10], 1
    %s1710 = scalar_lea.sflag [#allocation10], 1
    %1711 = vsyncpa %s1710, 1
    %1712 = vsyncpa [#allocation13], 1
    %1713 = vsyncpa [#allocation16], 1
    %1714 = vsyncpa [#allocation8], 1
    %s1715 = scalar_lea.sflag [#allocation8], 1
    %1716 = vsyncpa %s1715, 1

</llo_original>
